<compile_context>
chip_gen: v5e
topology: v5e:2x2
jax: 0.10.0
libtpu: 0.0.40
codegen_flags: <defaults>
</compile_context>

<pallas_src>
import jax
import jax.numpy as jnp
from jax.experimental import pallas as pl
from jax.experimental.pallas import tpu as pltpu

# Model dims (small, synthetic)
TS, TT = 8, 8          # encoder / decoder sequence lengths
B = 8                  # batch (>= 8 so sublane groups are fully used)
D_IN = 16              # encoder input feature dim
D_DEC = 8              # decoder input feature dim
H = 32                 # GRU hidden dim
D_OUT = 8              # decoder output (projection) dim


# ---------------------------------------------------------------------------
# Single fused kernel: encoder GRU + decoder GRU + deferred FC projection.
# src/trg arrive pre-flattened to [T*B, D]; output is [Tt*B, D_out].
# ---------------------------------------------------------------------------
def seq2seq_kernel(src_ref, trg_ref,
                   enc_wih_rz_ref, enc_wih_n_ref,
                   enc_whh_rz_ref, enc_whh_n_ref,
                   enc_brz_ref, enc_bn_ref, enc_bhn_ref,
                   dec_wih_rz_ref, dec_wih_n_ref,
                   dec_whh_rz_ref, dec_whh_n_ref,
                   dec_brz_ref, dec_bn_ref, dec_bhn_ref,
                   fc_w_ref, fc_b_ref,
                   out_ref):
    # Recurrent weights, read once (hoisted out of the unrolled recurrences).
    enc_whh_rz = enc_whh_rz_ref[...]          # [H, 2H]
    enc_whh_n = enc_whh_n_ref[...]            # [H, H]
    dec_whh_rz = dec_whh_rz_ref[...]          # [H, 2H]
    dec_whh_n = dec_whh_n_ref[...]            # [H, H]

    # Hoisted [1,H] -> [B,H] broadcasts of the n-gate hidden bias (done once,
    # not 16x inside the unrolled loops).
    enc_bhn = jnp.broadcast_to(enc_bhn_ref[...], (B, H))
    dec_bhn = jnp.broadcast_to(dec_bhn_ref[...], (B, H))

    # Hoisted input->hidden paths: batched MXU matmuls over all timesteps.
    # r/z and n projections are produced as separate, lane-aligned buffers so
    # the per-step gate math never slices a 3H-wide result on the serial chain.
    gi_rz_enc = (jnp.dot(src_ref[...], enc_wih_rz_ref[...],
                         preferred_element_type=jnp.float32)
                 + enc_brz_ref[...])                       # [Ts*B, 2H]
    gi_n_enc = (jnp.dot(src_ref[...], enc_wih_n_ref[...],
                        preferred_element_type=jnp.float32)
                + enc_bn_ref[...])                         # [Ts*B, H]
    gi_rz_dec = (jnp.dot(trg_ref[...], dec_wih_rz_ref[...],
                         preferred_element_type=jnp.float32)
                 + dec_brz_ref[...])                       # [Tt*B, 2H]
    gi_n_dec = (jnp.dot(trg_ref[...], dec_wih_n_ref[...],
                        preferred_element_type=jnp.float32)
                + dec_bn_ref[...])                         # [Tt*B, H]

    def gru_cell(gi_rz, gi_n, h, whh_rz, whh_n, bhn):
        """PyTorch GRU cell (gate order r, z, n); gi_* already contains b_ih
        (+ b_hh for r/z), so only h @ W_hh stays on the serial chain."""
        gh_rz = jnp.dot(h, whh_rz, preferred_element_type=jnp.float32)  # [B,2H]
        gh_n = jnp.dot(h, whh_n, preferred_element_type=jnp.float32)    # [B, H]
        rz = jax.nn.sigmoid(gi_rz + gh_rz)       # one merged EUP push for r & z
        r = rz[:, :H]
        z = rz[:, H:]
        n = jnp.tanh(gi_n + r * (gh_n + bhn))
        return n + z * (h - n)                   # == (1 - z) * n + z * h

    # Encoder recurrence (static trip count -> fully unrolled straight-line code).
    h = jnp.zeros((B, H), jnp.float32)
    for t in range(TS):
        h = gru_cell(gi_rz_enc[t * B:(t + 1) * B, :],
                     gi_n_enc[t * B:(t + 1) * B, :],
                     h, enc_whh_rz, enc_whh_n, enc_bhn)

    # Decoder recurrence; hiddens stay in registers (~8 vregs), no VMEM scratch.
    hs = []
    for t in range(TT):
        h = gru_cell(gi_rz_dec[t * B:(t + 1) * B, :],
                     gi_n_dec[t * B:(t + 1) * B, :],
                     h, dec_whh_rz, dec_whh_n, dec_bhn)
        hs.append(h)

    # Deferred output projection: one [Tt*B, H] x [H, D_out] matmul, one store.
    hs_all = jnp.concatenate(hs, axis=0)                   # [Tt*B, H]
    out_ref[...] = (jnp.dot(hs_all, fc_w_ref[...],
                            preferred_element_type=jnp.float32)
                    + fc_b_ref[...]).astype(out_ref.dtype)


def _fused_call(src2, trg2,
                enc_wih_rz, enc_wih_n, enc_whh_rz, enc_whh_n,
                enc_brz, enc_bn, enc_bhn,
                dec_wih_rz, dec_wih_n, dec_whh_rz, dec_whh_n,
                dec_brz, dec_bn, dec_bhn,
                fc_w, fc_b):
    vmem = pl.BlockSpec(memory_space=pltpu.MemorySpace.VMEM)
    return pl.pallas_call(
        seq2seq_kernel,
        out_shape=jax.ShapeDtypeStruct((TT * B, D_OUT), jnp.float32),
        in_specs=[vmem] * 18,
        out_specs=pl.BlockSpec(memory_space=pltpu.MemorySpace.VMEM),
    )(src2, trg2,
      enc_wih_rz, enc_wih_n, enc_whh_rz, enc_whh_n, enc_brz, enc_bn, enc_bhn,
      dec_wih_rz, dec_wih_n, dec_whh_rz, dec_whh_n, dec_brz, dec_bn, dec_bhn,
      fc_w, fc_b)


def _split_gru_params(wih, whh, bih, bhh):
    """Wrapper-side weight prep (layout plumbing only, no compute hoisting of
    per-step work): split r/z vs n columns and fold b_ih + b_hh for r/z."""
    brz = bih[:, :2 * H] + bhh[:, :2 * H]      # [1, 2H] folded r/z bias
    bn = bih[:, 2 * H:]                        # [1, H]  input bias of n gate
    bhn = bhh[:, 2 * H:]                       # [1, H]  hidden bias of n gate
    return (wih[:, :2 * H], wih[:, 2 * H:],    # W_ih split: rz / n
            whh[:, :2 * H], whh[:, 2 * H:],    # W_hh split: rz / n
            brz, bn, bhn)


@jax.jit
def seq2seq_forward(src, trg, params):
    """Pallas equivalent of Seq2Seq.forward(src, trg)."""
    # Kernel slicing uses the module constants; guard against mismatched callers.
    assert src.shape == (TS, B, D_IN), src.shape
    assert trg.shape == (TT, B, D_DEC), trg.shape

    enc = _split_gru_params(params["enc_wih"], params["enc_whh"],
                            params["enc_bih"], params["enc_bhh"])
    dec = _split_gru_params(params["dec_wih"], params["dec_whh"],
                            params["dec_bih"], params["dec_bhh"])

    # Wrapper-side layout plumbing only: flatten time x batch.
    src2 = src.reshape(TS * B, D_IN)
    trg2 = trg.reshape(TT * B, D_DEC)

    out2 = _fused_call(src2, trg2, *enc, *dec, params["fc_w"], params["fc_b"])
    return out2.reshape(TT, B, D_OUT)


# ---------------------------------------------------------------------------
# Pure-JAX reference (lax.scan, un-split / un-folded weights) for correctness.
# ---------------------------------------------------------------------------
def _gru_step_ref(x, h, wih, whh, bih, bhh):
    gi = jnp.dot(x, wih, preferred_element_type=jnp.float32) + bih
    gh = jnp.dot(h, whh, preferred_element_type=jnp.float32) + bhh
    r = jax.nn.sigmoid(gi[:, :H] + gh[:, :H])
    z = jax.nn.sigmoid(gi[:, H:2 * H] + gh[:, H:2 * H])
    n = jnp.tanh(gi[:, 2 * H:] + r * gh[:, 2 * H:])
    return (1.0 - z) * n + z * h


def _gru_scan(xs, h0, wih, whh, bih, bhh):
    def step(h, x):
        h2 = _gru_step_ref(x, h, wih, whh, bih, bhh)
        return h2, h2
    return jax.lax.scan(step, h0, xs)


def seq2seq_reference(src, trg, p):
    h_enc, _ = _gru_scan(src, jnp.zeros((src.shape[1], H), jnp.float32),
                         p["enc_wih"], p["enc_whh"], p["enc_bih"], p["enc_bhh"])
    _, hs = _gru_scan(trg, h_enc,
                      p["dec_wih"], p["dec_whh"], p["dec_bih"], p["dec_bhh"])
    return jnp.einsum("tbh,ho->tbo", hs, p["fc_w"]) + p["fc_b"][0]


if __name__ == "__main__":
    key = jax.random.PRNGKey(0)
    ks = jax.random.split(key, 10)
    scale = 0.1
    params = {
        "enc_wih": scale * jax.random.normal(ks[0], (D_IN, 3 * H), jnp.float32),
        "enc_whh": scale * jax.random.normal(ks[1], (H, 3 * H), jnp.float32),
        "enc_bih": scale * jax.random.normal(ks[2], (1, 3 * H), jnp.float32),
        "enc_bhh": scale * jax.random.normal(ks[3], (1, 3 * H), jnp.float32),
        "dec_wih": scale * jax.random.normal(ks[4], (D_DEC, 3 * H), jnp.float32),
        "dec_whh": scale * jax.random.normal(ks[5], (H, 3 * H), jnp.float32),
        "dec_bih": scale * jax.random.normal(ks[6], (1, 3 * H), jnp.float32),
        "dec_bhh": scale * jax.random.normal(ks[7], (1, 3 * H), jnp.float32),
        "fc_w": scale * jax.random.normal(ks[8], (H, D_OUT), jnp.float32),
        "fc_b": scale * jax.random.normal(ks[9], (1, D_OUT), jnp.float32),
    }

    kx = jax.random.split(jax.random.PRNGKey(0), 2)
    src = jax.random.normal(kx[0], (TS, B, D_IN), jnp.float32)
    trg = jax.random.normal(kx[1], (TT, B, D_DEC), jnp.float32)

    out = jax.block_until_ready(seq2seq_forward(src, trg, params))
    ref = jax.block_until_ready(seq2seq_reference(src, trg, params))

    assert out.shape == (TT, B, D_OUT), out.shape
    assert jnp.allclose(out, ref, atol=1e-4, rtol=1e-4), \
        float(jnp.max(jnp.abs(out - ref)))
    print("KERNEL_OK")
</pallas_src>

<mosaic_0001>
module attributes {stable_mosaic.version = 11 : i64} {
  func.func @seq2seq_kernel(%arg0: memref<64x16xf32, #tpu.memory_space<vmem>>, %arg1: memref<64x8xf32, #tpu.memory_space<vmem>>, %arg2: memref<16x64xf32, #tpu.memory_space<vmem>>, %arg3: memref<16x32xf32, #tpu.memory_space<vmem>>, %arg4: memref<32x64xf32, #tpu.memory_space<vmem>>, %arg5: memref<32x32xf32, #tpu.memory_space<vmem>>, %arg6: memref<1x64xf32, #tpu.memory_space<vmem>>, %arg7: memref<1x32xf32, #tpu.memory_space<vmem>>, %arg8: memref<1x32xf32, #tpu.memory_space<vmem>>, %arg9: memref<8x64xf32, #tpu.memory_space<vmem>>, %arg10: memref<8x32xf32, #tpu.memory_space<vmem>>, %arg11: memref<32x64xf32, #tpu.memory_space<vmem>>, %arg12: memref<32x32xf32, #tpu.memory_space<vmem>>, %arg13: memref<1x64xf32, #tpu.memory_space<vmem>>, %arg14: memref<1x32xf32, #tpu.memory_space<vmem>>, %arg15: memref<1x32xf32, #tpu.memory_space<vmem>>, %arg16: memref<32x8xf32, #tpu.memory_space<vmem>>, %arg17: memref<1x8xf32, #tpu.memory_space<vmem>>, %arg18: memref<64x8xf32, #tpu.memory_space<vmem>>) attributes {dimension_semantics = [], scalar_prefetch = 0 : i64, scratch_operands = 0 : i64, tpu.core_type = #tpu.core_type<tc>} {
    %c0 = arith.constant 0 : index
    %c0_0 = arith.constant 0 : index
    %0 = vector.load %arg4[%c0, %c0_0] : memref<32x64xf32, #tpu.memory_space<vmem>>, vector<32x64xf32>
    %c0_1 = arith.constant 0 : index
    %c0_2 = arith.constant 0 : index
    %1 = vector.load %arg5[%c0_1, %c0_2] : memref<32x32xf32, #tpu.memory_space<vmem>>, vector<32x32xf32>
    %c0_3 = arith.constant 0 : index
    %c0_4 = arith.constant 0 : index
    %2 = vector.load %arg11[%c0_3, %c0_4] : memref<32x64xf32, #tpu.memory_space<vmem>>, vector<32x64xf32>
    %c0_5 = arith.constant 0 : index
    %c0_6 = arith.constant 0 : index
    %3 = vector.load %arg12[%c0_5, %c0_6] : memref<32x32xf32, #tpu.memory_space<vmem>>, vector<32x32xf32>
    %c0_7 = arith.constant 0 : index
    %c0_8 = arith.constant 0 : index
    %4 = vector.load %arg8[%c0_7, %c0_8] : memref<1x32xf32, #tpu.memory_space<vmem>>, vector<1x32xf32>
    %5 = vector.shape_cast %4 : vector<1x32xf32> to vector<1x32xf32>
    %6 = vector.broadcast %5 : vector<1x32xf32> to vector<8x32xf32>
    %c0_9 = arith.constant 0 : index
    %c0_10 = arith.constant 0 : index
    %7 = vector.load %arg15[%c0_9, %c0_10] : memref<1x32xf32, #tpu.memory_space<vmem>>, vector<1x32xf32>
    %8 = vector.shape_cast %7 : vector<1x32xf32> to vector<1x32xf32>
    %9 = vector.broadcast %8 : vector<1x32xf32> to vector<8x32xf32>
    %c0_11 = arith.constant 0 : index
    %c0_12 = arith.constant 0 : index
    %10 = vector.load %arg0[%c0_11, %c0_12] : memref<64x16xf32, #tpu.memory_space<vmem>>, vector<64x16xf32>
    %c0_13 = arith.constant 0 : index
    %c0_14 = arith.constant 0 : index
    %11 = vector.load %arg2[%c0_13, %c0_14] : memref<16x64xf32, #tpu.memory_space<vmem>>, vector<16x64xf32>
    %cst = arith.constant dense<0.000000e+00> : vector<64x64xf32>
    %12 = tpu.matmul %10, %11, %cst {dimension_numbers = #tpu.dot_dimension_numbers<[1], [0], [0], [1], [0, 0, 1, 1], [], []>} : vector<64x16xf32>, vector<16x64xf32>, vector<64x64xf32> -> vector<64x64xf32>
    %c0_15 = arith.constant 0 : index
    %c0_16 = arith.constant 0 : index
    %13 = vector.load %arg6[%c0_15, %c0_16] : memref<1x64xf32, #tpu.memory_space<vmem>>, vector<1x64xf32>
    %14 = vector.broadcast %13 : vector<1x64xf32> to vector<64x64xf32>
    %15 = arith.addf %12, %14 : vector<64x64xf32>
    %c0_17 = arith.constant 0 : index
    %c0_18 = arith.constant 0 : index
    %16 = vector.load %arg0[%c0_17, %c0_18] : memref<64x16xf32, #tpu.memory_space<vmem>>, vector<64x16xf32>
    %c0_19 = arith.constant 0 : index
    %c0_20 = arith.constant 0 : index
    %17 = vector.load %arg3[%c0_19, %c0_20] : memref<16x32xf32, #tpu.memory_space<vmem>>, vector<16x32xf32>
    %cst_21 = arith.constant dense<0.000000e+00> : vector<64x32xf32>
    %18 = tpu.matmul %16, %17, %cst_21 {dimension_numbers = #tpu.dot_dimension_numbers<[1], [0], [0], [1], [0, 0, 1, 1], [], []>} : vector<64x16xf32>, vector<16x32xf32>, vector<64x32xf32> -> vector<64x32xf32>
    %c0_22 = arith.constant 0 : index
    %c0_23 = arith.constant 0 : index
    %19 = vector.load %arg7[%c0_22, %c0_23] : memref<1x32xf32, #tpu.memory_space<vmem>>, vector<1x32xf32>
    %20 = vector.broadcast %19 : vector<1x32xf32> to vector<64x32xf32>
    %21 = arith.addf %18, %20 : vector<64x32xf32>
    %c0_24 = arith.constant 0 : index
    %c0_25 = arith.constant 0 : index
    %22 = vector.load %arg1[%c0_24, %c0_25] : memref<64x8xf32, #tpu.memory_space<vmem>>, vector<64x8xf32>
    %c0_26 = arith.constant 0 : index
    %c0_27 = arith.constant 0 : index
    %23 = vector.load %arg9[%c0_26, %c0_27] : memref<8x64xf32, #tpu.memory_space<vmem>>, vector<8x64xf32>
    %cst_28 = arith.constant dense<0.000000e+00> : vector<64x64xf32>
    %24 = tpu.matmul %22, %23, %cst_28 {dimension_numbers = #tpu.dot_dimension_numbers<[1], [0], [0], [1], [0, 0, 1, 1], [], []>} : vector<64x8xf32>, vector<8x64xf32>, vector<64x64xf32> -> vector<64x64xf32>
    %c0_29 = arith.constant 0 : index
    %c0_30 = arith.constant 0 : index
    %25 = vector.load %arg13[%c0_29, %c0_30] : memref<1x64xf32, #tpu.memory_space<vmem>>, vector<1x64xf32>
    %26 = vector.broadcast %25 : vector<1x64xf32> to vector<64x64xf32>
    %27 = arith.addf %24, %26 : vector<64x64xf32>
    %c0_31 = arith.constant 0 : index
    %c0_32 = arith.constant 0 : index
    %28 = vector.load %arg1[%c0_31, %c0_32] : memref<64x8xf32, #tpu.memory_space<vmem>>, vector<64x8xf32>
    %c0_33 = arith.constant 0 : index
    %c0_34 = arith.constant 0 : index
    %29 = vector.load %arg10[%c0_33, %c0_34] : memref<8x32xf32, #tpu.memory_space<vmem>>, vector<8x32xf32>
    %cst_35 = arith.constant dense<0.000000e+00> : vector<64x32xf32>
    %30 = tpu.matmul %28, %29, %cst_35 {dimension_numbers = #tpu.dot_dimension_numbers<[1], [0], [0], [1], [0, 0, 1, 1], [], []>} : vector<64x8xf32>, vector<8x32xf32>, vector<64x32xf32> -> vector<64x32xf32>
    %c0_36 = arith.constant 0 : index
    %c0_37 = arith.constant 0 : index
    %31 = vector.load %arg14[%c0_36, %c0_37] : memref<1x32xf32, #tpu.memory_space<vmem>>, vector<1x32xf32>
    %32 = vector.broadcast %31 : vector<1x32xf32> to vector<64x32xf32>
    %33 = arith.addf %30, %32 : vector<64x32xf32>
    %cst_38 = arith.constant 0.000000e+00 : f32
    %34 = vector.broadcast %cst_38 : f32 to vector<8x32xf32>
    %35 = vector.extract_strided_slice %15 {offsets = [0, 0], sizes = [8, 64], strides = [1, 1]} : vector<64x64xf32> to vector<8x64xf32>
    %36 = vector.extract_strided_slice %21 {offsets = [0, 0], sizes = [8, 32], strides = [1, 1]} : vector<64x32xf32> to vector<8x32xf32>
    %cst_39 = arith.constant dense<0.000000e+00> : vector<8x64xf32>
    %37 = tpu.matmul %34, %0, %cst_39 {dimension_numbers = #tpu.dot_dimension_numbers<[1], [0], [0], [1], [0, 0, 1, 1], [], []>} : vector<8x32xf32>, vector<32x64xf32>, vector<8x64xf32> -> vector<8x64xf32>
    %cst_40 = arith.constant dense<0.000000e+00> : vector<8x32xf32>
    %38 = tpu.matmul %34, %1, %cst_40 {dimension_numbers = #tpu.dot_dimension_numbers<[1], [0], [0], [1], [0, 0, 1, 1], [], []>} : vector<8x32xf32>, vector<32x32xf32>, vector<8x32xf32> -> vector<8x32xf32>
    %39 = arith.addf %35, %37 : vector<8x64xf32>
    %40 = arith.negf %39 : vector<8x64xf32>
    %41 = math.exp %40 : vector<8x64xf32>
    %cst_41 = arith.constant 1.000000e+00 : f32
    %42 = vector.broadcast %cst_41 : f32 to vector<8x64xf32>
    %43 = arith.addf %42, %41 : vector<8x64xf32>
    %44 = arith.divf %42, %43 : vector<8x64xf32>
    %45 = vector.extract_strided_slice %44 {offsets = [0, 0], sizes = [8, 32], strides = [1, 1]} : vector<8x64xf32> to vector<8x32xf32>
    %46 = vector.extract_strided_slice %44 {offsets = [0, 32], sizes = [8, 32], strides = [1, 1]} : vector<8x64xf32> to vector<8x32xf32>
    %47 = arith.addf %38, %6 : vector<8x32xf32>
    %48 = arith.mulf %45, %47 : vector<8x32xf32>
    %49 = arith.addf %36, %48 : vector<8x32xf32>
    %50 = math.tanh %49 : vector<8x32xf32>
    %51 = arith.subf %34, %50 : vector<8x32xf32>
    %52 = arith.mulf %46, %51 : vector<8x32xf32>
    %53 = arith.addf %50, %52 : vector<8x32xf32>
    %54 = vector.extract_strided_slice %15 {offsets = [8, 0], sizes = [8, 64], strides = [1, 1]} : vector<64x64xf32> to vector<8x64xf32>
    %55 = vector.extract_strided_slice %21 {offsets = [8, 0], sizes = [8, 32], strides = [1, 1]} : vector<64x32xf32> to vector<8x32xf32>
    %cst_42 = arith.constant dense<0.000000e+00> : vector<8x64xf32>
    %56 = tpu.matmul %53, %0, %cst_42 {dimension_numbers = #tpu.dot_dimension_numbers<[1], [0], [0], [1], [0, 0, 1, 1], [], []>} : vector<8x32xf32>, vector<32x64xf32>, vector<8x64xf32> -> vector<8x64xf32>
    %cst_43 = arith.constant dense<0.000000e+00> : vector<8x32xf32>
    %57 = tpu.matmul %53, %1, %cst_43 {dimension_numbers = #tpu.dot_dimension_numbers<[1], [0], [0], [1], [0, 0, 1, 1], [], []>} : vector<8x32xf32>, vector<32x32xf32>, vector<8x32xf32> -> vector<8x32xf32>
    %58 = arith.addf %54, %56 : vector<8x64xf32>
    %59 = arith.negf %58 : vector<8x64xf32>
    %60 = math.exp %59 : vector<8x64xf32>
    %cst_44 = arith.constant 1.000000e+00 : f32
    %61 = vector.broadcast %cst_44 : f32 to vector<8x64xf32>
    %62 = arith.addf %61, %60 : vector<8x64xf32>
    %63 = arith.divf %61, %62 : vector<8x64xf32>
    %64 = vector.extract_strided_slice %63 {offsets = [0, 0], sizes = [8, 32], strides = [1, 1]} : vector<8x64xf32> to vector<8x32xf32>
    %65 = vector.extract_strided_slice %63 {offsets = [0, 32], sizes = [8, 32], strides = [1, 1]} : vector<8x64xf32> to vector<8x32xf32>
    %66 = arith.addf %57, %6 : vector<8x32xf32>
    %67 = arith.mulf %64, %66 : vector<8x32xf32>
    %68 = arith.addf %55, %67 : vector<8x32xf32>
    %69 = math.tanh %68 : vector<8x32xf32>
    %70 = arith.subf %53, %69 : vector<8x32xf32>
    %71 = arith.mulf %65, %70 : vector<8x32xf32>
    %72 = arith.addf %69, %71 : vector<8x32xf32>
    %73 = vector.extract_strided_slice %15 {offsets = [16, 0], sizes = [8, 64], strides = [1, 1]} : vector<64x64xf32> to vector<8x64xf32>
    %74 = vector.extract_strided_slice %21 {offsets = [16, 0], sizes = [8, 32], strides = [1, 1]} : vector<64x32xf32> to vector<8x32xf32>
    %cst_45 = arith.constant dense<0.000000e+00> : vector<8x64xf32>
    %75 = tpu.matmul %72, %0, %cst_45 {dimension_numbers = #tpu.dot_dimension_numbers<[1], [0], [0], [1], [0, 0, 1, 1], [], []>} : vector<8x32xf32>, vector<32x64xf32>, vector<8x64xf32> -> vector<8x64xf32>
    %cst_46 = arith.constant dense<0.000000e+00> : vector<8x32xf32>
    %76 = tpu.matmul %72, %1, %cst_46 {dimension_numbers = #tpu.dot_dimension_numbers<[1], [0], [0], [1], [0, 0, 1, 1], [], []>} : vector<8x32xf32>, vector<32x32xf32>, vector<8x32xf32> -> vector<8x32xf32>
    %77 = arith.addf %73, %75 : vector<8x64xf32>
    %78 = arith.negf %77 : vector<8x64xf32>
    %79 = math.exp %78 : vector<8x64xf32>
    %cst_47 = arith.constant 1.000000e+00 : f32
    %80 = vector.broadcast %cst_47 : f32 to vector<8x64xf32>
    %81 = arith.addf %80, %79 : vector<8x64xf32>
    %82 = arith.divf %80, %81 : vector<8x64xf32>
    %83 = vector.extract_strided_slice %82 {offsets = [0, 0], sizes = [8, 32], strides = [1, 1]} : vector<8x64xf32> to vector<8x32xf32>
    %84 = vector.extract_strided_slice %82 {offsets = [0, 32], sizes = [8, 32], strides = [1, 1]} : vector<8x64xf32> to vector<8x32xf32>
    %85 = arith.addf %76, %6 : vector<8x32xf32>
    %86 = arith.mulf %83, %85 : vector<8x32xf32>
    %87 = arith.addf %74, %86 : vector<8x32xf32>
    %88 = math.tanh %87 : vector<8x32xf32>
    %89 = arith.subf %72, %88 : vector<8x32xf32>
    %90 = arith.mulf %84, %89 : vector<8x32xf32>
    %91 = arith.addf %88, %90 : vector<8x32xf32>
    %92 = vector.extract_strided_slice %15 {offsets = [24, 0], sizes = [8, 64], strides = [1, 1]} : vector<64x64xf32> to vector<8x64xf32>
    %93 = vector.extract_strided_slice %21 {offsets = [24, 0], sizes = [8, 32], strides = [1, 1]} : vector<64x32xf32> to vector<8x32xf32>
    %cst_48 = arith.constant dense<0.000000e+00> : vector<8x64xf32>
    %94 = tpu.matmul %91, %0, %cst_48 {dimension_numbers = #tpu.dot_dimension_numbers<[1], [0], [0], [1], [0, 0, 1, 1], [], []>} : vector<8x32xf32>, vector<32x64xf32>, vector<8x64xf32> -> vector<8x64xf32>
    %cst_49 = arith.constant dense<0.000000e+00> : vector<8x32xf32>
    %95 = tpu.matmul %91, %1, %cst_49 {dimension_numbers = #tpu.dot_dimension_numbers<[1], [0], [0], [1], [0, 0, 1, 1], [], []>} : vector<8x32xf32>, vector<32x32xf32>, vector<8x32xf32> -> vector<8x32xf32>
    %96 = arith.addf %92, %94 : vector<8x64xf32>
    %97 = arith.negf %96 : vector<8x64xf32>
    %98 = math.exp %97 : vector<8x64xf32>
    %cst_50 = arith.constant 1.000000e+00 : f32
    %99 = vector.broadcast %cst_50 : f32 to vector<8x64xf32>
    %100 = arith.addf %99, %98 : vector<8x64xf32>
    %101 = arith.divf %99, %100 : vector<8x64xf32>
    %102 = vector.extract_strided_slice %101 {offsets = [0, 0], sizes = [8, 32], strides = [1, 1]} : vector<8x64xf32> to vector<8x32xf32>
    %103 = vector.extract_strided_slice %101 {offsets = [0, 32], sizes = [8, 32], strides = [1, 1]} : vector<8x64xf32> to vector<8x32xf32>
    %104 = arith.addf %95, %6 : vector<8x32xf32>
    %105 = arith.mulf %102, %104 : vector<8x32xf32>
    %106 = arith.addf %93, %105 : vector<8x32xf32>
    %107 = math.tanh %106 : vector<8x32xf32>
    %108 = arith.subf %91, %107 : vector<8x32xf32>
    %109 = arith.mulf %103, %108 : vector<8x32xf32>
    %110 = arith.addf %107, %109 : vector<8x32xf32>
    %111 = vector.extract_strided_slice %15 {offsets = [32, 0], sizes = [8, 64], strides = [1, 1]} : vector<64x64xf32> to vector<8x64xf32>
    %112 = vector.extract_strided_slice %21 {offsets = [32, 0], sizes = [8, 32], strides = [1, 1]} : vector<64x32xf32> to vector<8x32xf32>
    %cst_51 = arith.constant dense<0.000000e+00> : vector<8x64xf32>
    %113 = tpu.matmul %110, %0, %cst_51 {dimension_numbers = #tpu.dot_dimension_numbers<[1], [0], [0], [1], [0, 0, 1, 1], [], []>} : vector<8x32xf32>, vector<32x64xf32>, vector<8x64xf32> -> vector<8x64xf32>
    %cst_52 = arith.constant dense<0.000000e+00> : vector<8x32xf32>
    %114 = tpu.matmul %110, %1, %cst_52 {dimension_numbers = #tpu.dot_dimension_numbers<[1], [0], [0], [1], [0, 0, 1, 1], [], []>} : vector<8x32xf32>, vector<32x32xf32>, vector<8x32xf32> -> vector<8x32xf32>
    %115 = arith.addf %111, %113 : vector<8x64xf32>
    %116 = arith.negf %115 : vector<8x64xf32>
    %117 = math.exp %116 : vector<8x64xf32>
    %cst_53 = arith.constant 1.000000e+00 : f32
    %118 = vector.broadcast %cst_53 : f32 to vector<8x64xf32>
    %119 = arith.addf %118, %117 : vector<8x64xf32>
    %120 = arith.divf %118, %119 : vector<8x64xf32>
    %121 = vector.extract_strided_slice %120 {offsets = [0, 0], sizes = [8, 32], strides = [1, 1]} : vector<8x64xf32> to vector<8x32xf32>
    %122 = vector.extract_strided_slice %120 {offsets = [0, 32], sizes = [8, 32], strides = [1, 1]} : vector<8x64xf32> to vector<8x32xf32>
    %123 = arith.addf %114, %6 : vector<8x32xf32>
    %124 = arith.mulf %121, %123 : vector<8x32xf32>
    %125 = arith.addf %112, %124 : vector<8x32xf32>
    %126 = math.tanh %125 : vector<8x32xf32>
    %127 = arith.subf %110, %126 : vector<8x32xf32>
    %128 = arith.mulf %122, %127 : vector<8x32xf32>
    %129 = arith.addf %126, %128 : vector<8x32xf32>
    %130 = vector.extract_strided_slice %15 {offsets = [40, 0], sizes = [8, 64], strides = [1, 1]} : vector<64x64xf32> to vector<8x64xf32>
    %131 = vector.extract_strided_slice %21 {offsets = [40, 0], sizes = [8, 32], strides = [1, 1]} : vector<64x32xf32> to vector<8x32xf32>
    %cst_54 = arith.constant dense<0.000000e+00> : vector<8x64xf32>
    %132 = tpu.matmul %129, %0, %cst_54 {dimension_numbers = #tpu.dot_dimension_numbers<[1], [0], [0], [1], [0, 0, 1, 1], [], []>} : vector<8x32xf32>, vector<32x64xf32>, vector<8x64xf32> -> vector<8x64xf32>
    %cst_55 = arith.constant dense<0.000000e+00> : vector<8x32xf32>
    %133 = tpu.matmul %129, %1, %cst_55 {dimension_numbers = #tpu.dot_dimension_numbers<[1], [0], [0], [1], [0, 0, 1, 1], [], []>} : vector<8x32xf32>, vector<32x32xf32>, vector<8x32xf32> -> vector<8x32xf32>
    %134 = arith.addf %130, %132 : vector<8x64xf32>
    %135 = arith.negf %134 : vector<8x64xf32>
    %136 = math.exp %135 : vector<8x64xf32>
    %cst_56 = arith.constant 1.000000e+00 : f32
    %137 = vector.broadcast %cst_56 : f32 to vector<8x64xf32>
    %138 = arith.addf %137, %136 : vector<8x64xf32>
    %139 = arith.divf %137, %138 : vector<8x64xf32>
    %140 = vector.extract_strided_slice %139 {offsets = [0, 0], sizes = [8, 32], strides = [1, 1]} : vector<8x64xf32> to vector<8x32xf32>
    %141 = vector.extract_strided_slice %139 {offsets = [0, 32], sizes = [8, 32], strides = [1, 1]} : vector<8x64xf32> to vector<8x32xf32>
    %142 = arith.addf %133, %6 : vector<8x32xf32>
    %143 = arith.mulf %140, %142 : vector<8x32xf32>
    %144 = arith.addf %131, %143 : vector<8x32xf32>
    %145 = math.tanh %144 : vector<8x32xf32>
    %146 = arith.subf %129, %145 : vector<8x32xf32>
    %147 = arith.mulf %141, %146 : vector<8x32xf32>
    %148 = arith.addf %145, %147 : vector<8x32xf32>
    %149 = vector.extract_strided_slice %15 {offsets = [48, 0], sizes = [8, 64], strides = [1, 1]} : vector<64x64xf32> to vector<8x64xf32>
    %150 = vector.extract_strided_slice %21 {offsets = [48, 0], sizes = [8, 32], strides = [1, 1]} : vector<64x32xf32> to vector<8x32xf32>
    %cst_57 = arith.constant dense<0.000000e+00> : vector<8x64xf32>
    %151 = tpu.matmul %148, %0, %cst_57 {dimension_numbers = #tpu.dot_dimension_numbers<[1], [0], [0], [1], [0, 0, 1, 1], [], []>} : vector<8x32xf32>, vector<32x64xf32>, vector<8x64xf32> -> vector<8x64xf32>
    %cst_58 = arith.constant dense<0.000000e+00> : vector<8x32xf32>
    %152 = tpu.matmul %148, %1, %cst_58 {dimension_numbers = #tpu.dot_dimension_numbers<[1], [0], [0], [1], [0, 0, 1, 1], [], []>} : vector<8x32xf32>, vector<32x32xf32>, vector<8x32xf32> -> vector<8x32xf32>
    %153 = arith.addf %149, %151 : vector<8x64xf32>
    %154 = arith.negf %153 : vector<8x64xf32>
    %155 = math.exp %154 : vector<8x64xf32>
    %cst_59 = arith.constant 1.000000e+00 : f32
    %156 = vector.broadcast %cst_59 : f32 to vector<8x64xf32>
    %157 = arith.addf %156, %155 : vector<8x64xf32>
    %158 = arith.divf %156, %157 : vector<8x64xf32>
    %159 = vector.extract_strided_slice %158 {offsets = [0, 0], sizes = [8, 32], strides = [1, 1]} : vector<8x64xf32> to vector<8x32xf32>
    %160 = vector.extract_strided_slice %158 {offsets = [0, 32], sizes = [8, 32], strides = [1, 1]} : vector<8x64xf32> to vector<8x32xf32>
    %161 = arith.addf %152, %6 : vector<8x32xf32>
    %162 = arith.mulf %159, %161 : vector<8x32xf32>
    %163 = arith.addf %150, %162 : vector<8x32xf32>
    %164 = math.tanh %163 : vector<8x32xf32>
    %165 = arith.subf %148, %164 : vector<8x32xf32>
    %166 = arith.mulf %160, %165 : vector<8x32xf32>
    %167 = arith.addf %164, %166 : vector<8x32xf32>
    %168 = vector.extract_strided_slice %15 {offsets = [56, 0], sizes = [8, 64], strides = [1, 1]} : vector<64x64xf32> to vector<8x64xf32>
    %169 = vector.extract_strided_slice %21 {offsets = [56, 0], sizes = [8, 32], strides = [1, 1]} : vector<64x32xf32> to vector<8x32xf32>
    %cst_60 = arith.constant dense<0.000000e+00> : vector<8x64xf32>
    %170 = tpu.matmul %167, %0, %cst_60 {dimension_numbers = #tpu.dot_dimension_numbers<[1], [0], [0], [1], [0, 0, 1, 1], [], []>} : vector<8x32xf32>, vector<32x64xf32>, vector<8x64xf32> -> vector<8x64xf32>
    %cst_61 = arith.constant dense<0.000000e+00> : vector<8x32xf32>
    %171 = tpu.matmul %167, %1, %cst_61 {dimension_numbers = #tpu.dot_dimension_numbers<[1], [0], [0], [1], [0, 0, 1, 1], [], []>} : vector<8x32xf32>, vector<32x32xf32>, vector<8x32xf32> -> vector<8x32xf32>
    %172 = arith.addf %168, %170 : vector<8x64xf32>
    %173 = arith.negf %172 : vector<8x64xf32>
    %174 = math.exp %173 : vector<8x64xf32>
    %cst_62 = arith.constant 1.000000e+00 : f32
    %175 = vector.broadcast %cst_62 : f32 to vector<8x64xf32>
    %176 = arith.addf %175, %174 : vector<8x64xf32>
    %177 = arith.divf %175, %176 : vector<8x64xf32>
    %178 = vector.extract_strided_slice %177 {offsets = [0, 0], sizes = [8, 32], strides = [1, 1]} : vector<8x64xf32> to vector<8x32xf32>
    %179 = vector.extract_strided_slice %177 {offsets = [0, 32], sizes = [8, 32], strides = [1, 1]} : vector<8x64xf32> to vector<8x32xf32>
    %180 = arith.addf %171, %6 : vector<8x32xf32>
    %181 = arith.mulf %178, %180 : vector<8x32xf32>
    %182 = arith.addf %169, %181 : vector<8x32xf32>
    %183 = math.tanh %182 : vector<8x32xf32>
    %184 = arith.subf %167, %183 : vector<8x32xf32>
    %185 = arith.mulf %179, %184 : vector<8x32xf32>
    %186 = arith.addf %183, %185 : vector<8x32xf32>
    %187 = vector.extract_strided_slice %27 {offsets = [0, 0], sizes = [8, 64], strides = [1, 1]} : vector<64x64xf32> to vector<8x64xf32>
    %188 = vector.extract_strided_slice %33 {offsets = [0, 0], sizes = [8, 32], strides = [1, 1]} : vector<64x32xf32> to vector<8x32xf32>
    %cst_63 = arith.constant dense<0.000000e+00> : vector<8x64xf32>
    %189 = tpu.matmul %186, %2, %cst_63 {dimension_numbers = #tpu.dot_dimension_numbers<[1], [0], [0], [1], [0, 0, 1, 1], [], []>} : vector<8x32xf32>, vector<32x64xf32>, vector<8x64xf32> -> vector<8x64xf32>
    %cst_64 = arith.constant dense<0.000000e+00> : vector<8x32xf32>
    %190 = tpu.matmul %186, %3, %cst_64 {dimension_numbers = #tpu.dot_dimension_numbers<[1], [0], [0], [1], [0, 0, 1, 1], [], []>} : vector<8x32xf32>, vector<32x32xf32>, vector<8x32xf32> -> vector<8x32xf32>
    %191 = arith.addf %187, %189 : vector<8x64xf32>
    %192 = arith.negf %191 : vector<8x64xf32>
    %193 = math.exp %192 : vector<8x64xf32>
    %cst_65 = arith.constant 1.000000e+00 : f32
    %194 = vector.broadcast %cst_65 : f32 to vector<8x64xf32>
    %195 = arith.addf %194, %193 : vector<8x64xf32>
    %196 = arith.divf %194, %195 : vector<8x64xf32>
    %197 = vector.extract_strided_slice %196 {offsets = [0, 0], sizes = [8, 32], strides = [1, 1]} : vector<8x64xf32> to vector<8x32xf32>
    %198 = vector.extract_strided_slice %196 {offsets = [0, 32], sizes = [8, 32], strides = [1, 1]} : vector<8x64xf32> to vector<8x32xf32>
    %199 = arith.addf %190, %9 : vector<8x32xf32>
    %200 = arith.mulf %197, %199 : vector<8x32xf32>
    %201 = arith.addf %188, %200 : vector<8x32xf32>
    %202 = math.tanh %201 : vector<8x32xf32>
    %203 = arith.subf %186, %202 : vector<8x32xf32>
    %204 = arith.mulf %198, %203 : vector<8x32xf32>
    %205 = arith.addf %202, %204 : vector<8x32xf32>
    %206 = vector.extract_strided_slice %27 {offsets = [8, 0], sizes = [8, 64], strides = [1, 1]} : vector<64x64xf32> to vector<8x64xf32>
    %207 = vector.extract_strided_slice %33 {offsets = [8, 0], sizes = [8, 32], strides = [1, 1]} : vector<64x32xf32> to vector<8x32xf32>
    %cst_66 = arith.constant dense<0.000000e+00> : vector<8x64xf32>
    %208 = tpu.matmul %205, %2, %cst_66 {dimension_numbers = #tpu.dot_dimension_numbers<[1], [0], [0], [1], [0, 0, 1, 1], [], []>} : vector<8x32xf32>, vector<32x64xf32>, vector<8x64xf32> -> vector<8x64xf32>
    %cst_67 = arith.constant dense<0.000000e+00> : vector<8x32xf32>
    %209 = tpu.matmul %205, %3, %cst_67 {dimension_numbers = #tpu.dot_dimension_numbers<[1], [0], [0], [1], [0, 0, 1, 1], [], []>} : vector<8x32xf32>, vector<32x32xf32>, vector<8x32xf32> -> vector<8x32xf32>
    %210 = arith.addf %206, %208 : vector<8x64xf32>
    %211 = arith.negf %210 : vector<8x64xf32>
    %212 = math.exp %211 : vector<8x64xf32>
    %cst_68 = arith.constant 1.000000e+00 : f32
    %213 = vector.broadcast %cst_68 : f32 to vector<8x64xf32>
    %214 = arith.addf %213, %212 : vector<8x64xf32>
    %215 = arith.divf %213, %214 : vector<8x64xf32>
    %216 = vector.extract_strided_slice %215 {offsets = [0, 0], sizes = [8, 32], strides = [1, 1]} : vector<8x64xf32> to vector<8x32xf32>
    %217 = vector.extract_strided_slice %215 {offsets = [0, 32], sizes = [8, 32], strides = [1, 1]} : vector<8x64xf32> to vector<8x32xf32>
    %218 = arith.addf %209, %9 : vector<8x32xf32>
    %219 = arith.mulf %216, %218 : vector<8x32xf32>
    %220 = arith.addf %207, %219 : vector<8x32xf32>
    %221 = math.tanh %220 : vector<8x32xf32>
    %222 = arith.subf %205, %221 : vector<8x32xf32>
    %223 = arith.mulf %217, %222 : vector<8x32xf32>
    %224 = arith.addf %221, %223 : vector<8x32xf32>
    %225 = vector.extract_strided_slice %27 {offsets = [16, 0], sizes = [8, 64], strides = [1, 1]} : vector<64x64xf32> to vector<8x64xf32>
    %226 = vector.extract_strided_slice %33 {offsets = [16, 0], sizes = [8, 32], strides = [1, 1]} : vector<64x32xf32> to vector<8x32xf32>
    %cst_69 = arith.constant dense<0.000000e+00> : vector<8x64xf32>
    %227 = tpu.matmul %224, %2, %cst_69 {dimension_numbers = #tpu.dot_dimension_numbers<[1], [0], [0], [1], [0, 0, 1, 1], [], []>} : vector<8x32xf32>, vector<32x64xf32>, vector<8x64xf32> -> vector<8x64xf32>
    %cst_70 = arith.constant dense<0.000000e+00> : vector<8x32xf32>
    %228 = tpu.matmul %224, %3, %cst_70 {dimension_numbers = #tpu.dot_dimension_numbers<[1], [0], [0], [1], [0, 0, 1, 1], [], []>} : vector<8x32xf32>, vector<32x32xf32>, vector<8x32xf32> -> vector<8x32xf32>
    %229 = arith.addf %225, %227 : vector<8x64xf32>
    %230 = arith.negf %229 : vector<8x64xf32>
    %231 = math.exp %230 : vector<8x64xf32>
    %cst_71 = arith.constant 1.000000e+00 : f32
    %232 = vector.broadcast %cst_71 : f32 to vector<8x64xf32>
    %233 = arith.addf %232, %231 : vector<8x64xf32>
    %234 = arith.divf %232, %233 : vector<8x64xf32>
    %235 = vector.extract_strided_slice %234 {offsets = [0, 0], sizes = [8, 32], strides = [1, 1]} : vector<8x64xf32> to vector<8x32xf32>
    %236 = vector.extract_strided_slice %234 {offsets = [0, 32], sizes = [8, 32], strides = [1, 1]} : vector<8x64xf32> to vector<8x32xf32>
    %237 = arith.addf %228, %9 : vector<8x32xf32>
    %238 = arith.mulf %235, %237 : vector<8x32xf32>
    %239 = arith.addf %226, %238 : vector<8x32xf32>
    %240 = math.tanh %239 : vector<8x32xf32>
    %241 = arith.subf %224, %240 : vector<8x32xf32>
    %242 = arith.mulf %236, %241 : vector<8x32xf32>
    %243 = arith.addf %240, %242 : vector<8x32xf32>
    %244 = vector.extract_strided_slice %27 {offsets = [24, 0], sizes = [8, 64], strides = [1, 1]} : vector<64x64xf32> to vector<8x64xf32>
    %245 = vector.extract_strided_slice %33 {offsets = [24, 0], sizes = [8, 32], strides = [1, 1]} : vector<64x32xf32> to vector<8x32xf32>
    %cst_72 = arith.constant dense<0.000000e+00> : vector<8x64xf32>
    %246 = tpu.matmul %243, %2, %cst_72 {dimension_numbers = #tpu.dot_dimension_numbers<[1], [0], [0], [1], [0, 0, 1, 1], [], []>} : vector<8x32xf32>, vector<32x64xf32>, vector<8x64xf32> -> vector<8x64xf32>
    %cst_73 = arith.constant dense<0.000000e+00> : vector<8x32xf32>
    %247 = tpu.matmul %243, %3, %cst_73 {dimension_numbers = #tpu.dot_dimension_numbers<[1], [0], [0], [1], [0, 0, 1, 1], [], []>} : vector<8x32xf32>, vector<32x32xf32>, vector<8x32xf32> -> vector<8x32xf32>
    %248 = arith.addf %244, %246 : vector<8x64xf32>
    %249 = arith.negf %248 : vector<8x64xf32>
    %250 = math.exp %249 : vector<8x64xf32>
    %cst_74 = arith.constant 1.000000e+00 : f32
    %251 = vector.broadcast %cst_74 : f32 to vector<8x64xf32>
    %252 = arith.addf %251, %250 : vector<8x64xf32>
    %253 = arith.divf %251, %252 : vector<8x64xf32>
    %254 = vector.extract_strided_slice %253 {offsets = [0, 0], sizes = [8, 32], strides = [1, 1]} : vector<8x64xf32> to vector<8x32xf32>
    %255 = vector.extract_strided_slice %253 {offsets = [0, 32], sizes = [8, 32], strides = [1, 1]} : vector<8x64xf32> to vector<8x32xf32>
    %256 = arith.addf %247, %9 : vector<8x32xf32>
    %257 = arith.mulf %254, %256 : vector<8x32xf32>
    %258 = arith.addf %245, %257 : vector<8x32xf32>
    %259 = math.tanh %258 : vector<8x32xf32>
    %260 = arith.subf %243, %259 : vector<8x32xf32>
    %261 = arith.mulf %255, %260 : vector<8x32xf32>
    %262 = arith.addf %259, %261 : vector<8x32xf32>
    %263 = vector.extract_strided_slice %27 {offsets = [32, 0], sizes = [8, 64], strides = [1, 1]} : vector<64x64xf32> to vector<8x64xf32>
    %264 = vector.extract_strided_slice %33 {offsets = [32, 0], sizes = [8, 32], strides = [1, 1]} : vector<64x32xf32> to vector<8x32xf32>
    %cst_75 = arith.constant dense<0.000000e+00> : vector<8x64xf32>
    %265 = tpu.matmul %262, %2, %cst_75 {dimension_numbers = #tpu.dot_dimension_numbers<[1], [0], [0], [1], [0, 0, 1, 1], [], []>} : vector<8x32xf32>, vector<32x64xf32>, vector<8x64xf32> -> vector<8x64xf32>
    %cst_76 = arith.constant dense<0.000000e+00> : vector<8x32xf32>
    %266 = tpu.matmul %262, %3, %cst_76 {dimension_numbers = #tpu.dot_dimension_numbers<[1], [0], [0], [1], [0, 0, 1, 1], [], []>} : vector<8x32xf32>, vector<32x32xf32>, vector<8x32xf32> -> vector<8x32xf32>
    %267 = arith.addf %263, %265 : vector<8x64xf32>
    %268 = arith.negf %267 : vector<8x64xf32>
    %269 = math.exp %268 : vector<8x64xf32>
    %cst_77 = arith.constant 1.000000e+00 : f32
    %270 = vector.broadcast %cst_77 : f32 to vector<8x64xf32>
    %271 = arith.addf %270, %269 : vector<8x64xf32>
    %272 = arith.divf %270, %271 : vector<8x64xf32>
    %273 = vector.extract_strided_slice %272 {offsets = [0, 0], sizes = [8, 32], strides = [1, 1]} : vector<8x64xf32> to vector<8x32xf32>
    %274 = vector.extract_strided_slice %272 {offsets = [0, 32], sizes = [8, 32], strides = [1, 1]} : vector<8x64xf32> to vector<8x32xf32>
    %275 = arith.addf %266, %9 : vector<8x32xf32>
    %276 = arith.mulf %273, %275 : vector<8x32xf32>
    %277 = arith.addf %264, %276 : vector<8x32xf32>
    %278 = math.tanh %277 : vector<8x32xf32>
    %279 = arith.subf %262, %278 : vector<8x32xf32>
    %280 = arith.mulf %274, %279 : vector<8x32xf32>
    %281 = arith.addf %278, %280 : vector<8x32xf32>
    %282 = vector.extract_strided_slice %27 {offsets = [40, 0], sizes = [8, 64], strides = [1, 1]} : vector<64x64xf32> to vector<8x64xf32>
    %283 = vector.extract_strided_slice %33 {offsets = [40, 0], sizes = [8, 32], strides = [1, 1]} : vector<64x32xf32> to vector<8x32xf32>
    %cst_78 = arith.constant dense<0.000000e+00> : vector<8x64xf32>
    %284 = tpu.matmul %281, %2, %cst_78 {dimension_numbers = #tpu.dot_dimension_numbers<[1], [0], [0], [1], [0, 0, 1, 1], [], []>} : vector<8x32xf32>, vector<32x64xf32>, vector<8x64xf32> -> vector<8x64xf32>
    %cst_79 = arith.constant dense<0.000000e+00> : vector<8x32xf32>
    %285 = tpu.matmul %281, %3, %cst_79 {dimension_numbers = #tpu.dot_dimension_numbers<[1], [0], [0], [1], [0, 0, 1, 1], [], []>} : vector<8x32xf32>, vector<32x32xf32>, vector<8x32xf32> -> vector<8x32xf32>
    %286 = arith.addf %282, %284 : vector<8x64xf32>
    %287 = arith.negf %286 : vector<8x64xf32>
    %288 = math.exp %287 : vector<8x64xf32>
    %cst_80 = arith.constant 1.000000e+00 : f32
    %289 = vector.broadcast %cst_80 : f32 to vector<8x64xf32>
    %290 = arith.addf %289, %288 : vector<8x64xf32>
    %291 = arith.divf %289, %290 : vector<8x64xf32>
    %292 = vector.extract_strided_slice %291 {offsets = [0, 0], sizes = [8, 32], strides = [1, 1]} : vector<8x64xf32> to vector<8x32xf32>
    %293 = vector.extract_strided_slice %291 {offsets = [0, 32], sizes = [8, 32], strides = [1, 1]} : vector<8x64xf32> to vector<8x32xf32>
    %294 = arith.addf %285, %9 : vector<8x32xf32>
    %295 = arith.mulf %292, %294 : vector<8x32xf32>
    %296 = arith.addf %283, %295 : vector<8x32xf32>
    %297 = math.tanh %296 : vector<8x32xf32>
    %298 = arith.subf %281, %297 : vector<8x32xf32>
    %299 = arith.mulf %293, %298 : vector<8x32xf32>
    %300 = arith.addf %297, %299 : vector<8x32xf32>
    %301 = vector.extract_strided_slice %27 {offsets = [48, 0], sizes = [8, 64], strides = [1, 1]} : vector<64x64xf32> to vector<8x64xf32>
    %302 = vector.extract_strided_slice %33 {offsets = [48, 0], sizes = [8, 32], strides = [1, 1]} : vector<64x32xf32> to vector<8x32xf32>
    %cst_81 = arith.constant dense<0.000000e+00> : vector<8x64xf32>
    %303 = tpu.matmul %300, %2, %cst_81 {dimension_numbers = #tpu.dot_dimension_numbers<[1], [0], [0], [1], [0, 0, 1, 1], [], []>} : vector<8x32xf32>, vector<32x64xf32>, vector<8x64xf32> -> vector<8x64xf32>
    %cst_82 = arith.constant dense<0.000000e+00> : vector<8x32xf32>
    %304 = tpu.matmul %300, %3, %cst_82 {dimension_numbers = #tpu.dot_dimension_numbers<[1], [0], [0], [1], [0, 0, 1, 1], [], []>} : vector<8x32xf32>, vector<32x32xf32>, vector<8x32xf32> -> vector<8x32xf32>
    %305 = arith.addf %301, %303 : vector<8x64xf32>
    %306 = arith.negf %305 : vector<8x64xf32>
    %307 = math.exp %306 : vector<8x64xf32>
    %cst_83 = arith.constant 1.000000e+00 : f32
    %308 = vector.broadcast %cst_83 : f32 to vector<8x64xf32>
    %309 = arith.addf %308, %307 : vector<8x64xf32>
    %310 = arith.divf %308, %309 : vector<8x64xf32>
    %311 = vector.extract_strided_slice %310 {offsets = [0, 0], sizes = [8, 32], strides = [1, 1]} : vector<8x64xf32> to vector<8x32xf32>
    %312 = vector.extract_strided_slice %310 {offsets = [0, 32], sizes = [8, 32], strides = [1, 1]} : vector<8x64xf32> to vector<8x32xf32>
    %313 = arith.addf %304, %9 : vector<8x32xf32>
    %314 = arith.mulf %311, %313 : vector<8x32xf32>
    %315 = arith.addf %302, %314 : vector<8x32xf32>
    %316 = math.tanh %315 : vector<8x32xf32>
    %317 = arith.subf %300, %316 : vector<8x32xf32>
    %318 = arith.mulf %312, %317 : vector<8x32xf32>
    %319 = arith.addf %316, %318 : vector<8x32xf32>
    %320 = vector.extract_strided_slice %27 {offsets = [56, 0], sizes = [8, 64], strides = [1, 1]} : vector<64x64xf32> to vector<8x64xf32>
    %321 = vector.extract_strided_slice %33 {offsets = [56, 0], sizes = [8, 32], strides = [1, 1]} : vector<64x32xf32> to vector<8x32xf32>
    %cst_84 = arith.constant dense<0.000000e+00> : vector<8x64xf32>
    %322 = tpu.matmul %319, %2, %cst_84 {dimension_numbers = #tpu.dot_dimension_numbers<[1], [0], [0], [1], [0, 0, 1, 1], [], []>} : vector<8x32xf32>, vector<32x64xf32>, vector<8x64xf32> -> vector<8x64xf32>
    %cst_85 = arith.constant dense<0.000000e+00> : vector<8x32xf32>
    %323 = tpu.matmul %319, %3, %cst_85 {dimension_numbers = #tpu.dot_dimension_numbers<[1], [0], [0], [1], [0, 0, 1, 1], [], []>} : vector<8x32xf32>, vector<32x32xf32>, vector<8x32xf32> -> vector<8x32xf32>
    %324 = arith.addf %320, %322 : vector<8x64xf32>
    %325 = arith.negf %324 : vector<8x64xf32>
    %326 = math.exp %325 : vector<8x64xf32>
    %cst_86 = arith.constant 1.000000e+00 : f32
    %327 = vector.broadcast %cst_86 : f32 to vector<8x64xf32>
    %328 = arith.addf %327, %326 : vector<8x64xf32>
    %329 = arith.divf %327, %328 : vector<8x64xf32>
    %330 = vector.extract_strided_slice %329 {offsets = [0, 0], sizes = [8, 32], strides = [1, 1]} : vector<8x64xf32> to vector<8x32xf32>
    %331 = vector.extract_strided_slice %329 {offsets = [0, 32], sizes = [8, 32], strides = [1, 1]} : vector<8x64xf32> to vector<8x32xf32>
    %332 = arith.addf %323, %9 : vector<8x32xf32>
    %333 = arith.mulf %330, %332 : vector<8x32xf32>
    %334 = arith.addf %321, %333 : vector<8x32xf32>
    %335 = math.tanh %334 : vector<8x32xf32>
    %336 = arith.subf %319, %335 : vector<8x32xf32>
    %337 = arith.mulf %331, %336 : vector<8x32xf32>
    %338 = arith.addf %335, %337 : vector<8x32xf32>
    %339 = tpu.concatenate %205, %224, %243, %262, %281, %300, %319, %338 in 0 : vector<8x32xf32>, vector<8x32xf32>, vector<8x32xf32>, vector<8x32xf32>, vector<8x32xf32>, vector<8x32xf32>, vector<8x32xf32>, vector<8x32xf32> -> vector<64x32xf32>
    %c0_87 = arith.constant 0 : index
    %c0_88 = arith.constant 0 : index
    %340 = vector.load %arg16[%c0_87, %c0_88] : memref<32x8xf32, #tpu.memory_space<vmem>>, vector<32x8xf32>
    %cst_89 = arith.constant dense<0.000000e+00> : vector<64x8xf32>
    %341 = tpu.matmul %339, %340, %cst_89 {dimension_numbers = #tpu.dot_dimension_numbers<[1], [0], [0], [1], [0, 0, 1, 1], [], []>} : vector<64x32xf32>, vector<32x8xf32>, vector<64x8xf32> -> vector<64x8xf32>
    %c0_90 = arith.constant 0 : index
    %c0_91 = arith.constant 0 : index
    %342 = vector.load %arg17[%c0_90, %c0_91] : memref<1x8xf32, #tpu.memory_space<vmem>>, vector<1x8xf32>
    %343 = vector.broadcast %342 : vector<1x8xf32> to vector<64x8xf32>
    %344 = arith.addf %341, %343 : vector<64x8xf32>
    %c0_92 = arith.constant 0 : index
    %c0_93 = arith.constant 0 : index
    %345 = vector.load %arg18[%c0_92, %c0_93] : memref<64x8xf32, #tpu.memory_space<vmem>>, vector<64x8xf32>
    tpu.vector_store %arg18[%c0_92, %c0_93], %344 {strides = array<i32>} : memref<64x8xf32, #tpu.memory_space<vmem>>, vector<64x8xf32>,
    return
  }
}

</mosaic_0001>

<llo_original>
// kernel: seq2seq_forward.1
$region0: #{seq2seq_forward.1}
  #allocation0 [shape = 'u32[]', space=smem, size = 0x4, offset = 0x4, fixed_abs, tag = 'smem constant byte address 0x4 - core index']
  #allocation1 [shape = 'u32[72,128]{1,0:T(1,128)}', space=vmem, size = 0x9000, scoped, tag = 'internal scratch']
  %s0 = inlined_call_operand.vmem [shape: f32[64,16], index: 0, kind: input, shape index: {}]
  %s1 = inlined_call_operand.vmem [shape: f32[64,8], index: 1, kind: input, shape index: {}]
  %s2 = inlined_call_operand.vmem [shape: f32[16,64], index: 2, kind: input, shape index: {}]
  %s3 = inlined_call_operand.vmem [shape: f32[16,32], index: 3, kind: input, shape index: {}]
  %s4 = inlined_call_operand.vmem [shape: f32[32,64], index: 4, kind: input, shape index: {}]
  %s5 = inlined_call_operand.vmem [shape: f32[32,32], index: 5, kind: input, shape index: {}]
  %s6 = inlined_call_operand.vmem [shape: f32[1,64], index: 6, kind: input, shape index: {}]
  %s7 = inlined_call_operand.vmem [shape: f32[1,32], index: 7, kind: input, shape index: {}]
  %s8 = inlined_call_operand.vmem [shape: f32[1,32], index: 8, kind: input, shape index: {}]
  %s9 = inlined_call_operand.vmem [shape: f32[8,64], index: 9, kind: input, shape index: {}]
  %s10 = inlined_call_operand.vmem [shape: f32[8,32], index: 10, kind: input, shape index: {}]
  %s11 = inlined_call_operand.vmem [shape: f32[32,64], index: 11, kind: input, shape index: {}]
  %s12 = inlined_call_operand.vmem [shape: f32[32,32], index: 12, kind: input, shape index: {}]
  %s13 = inlined_call_operand.vmem [shape: f32[1,64], index: 13, kind: input, shape index: {}]
  %s14 = inlined_call_operand.vmem [shape: f32[1,32], index: 14, kind: input, shape index: {}]
  %s15 = inlined_call_operand.vmem [shape: f32[1,32], index: 15, kind: input, shape index: {}]
  %s16 = inlined_call_operand.vmem [shape: f32[32,8], index: 16, kind: input, shape index: {}]
  %s17 = inlined_call_operand.vmem [shape: f32[1,8], index: 17, kind: input, shape index: {}]
  %s18 = inlined_call_operand.hbm [shape: f32[64,8], index: 18, kind: output, shape index: {}]
  %s19 = sld [smem:[#allocation0]]
  $region82: #{seq2seq_forward.1} parent=0
    _
  %s21 = ssub.s32 1, %s19
  %s22 = scalar_select 0, %s21, %s19
  $region1: #{seq2seq_forward.1} parent=0
    #allocation2 [shape = 'u8[32768]{0}', space=vmem, size = 0x8000, scoped, tag = 'output window, operand 0, single buffered']
    #allocation3 [shape = 's32[1]{0}', space=sflag, size = 0x4, scoped, tag = 'scoped memory for seq2seq_forward.1']
    %23 = vsyncpa [#allocation3], 0
    // Predicated region
    $region2: #{seq2seq_forward.1} parent=1 // pred_check
      _
    $region3: #{seq2seq_forward.1} parent=1 // pred_check_branch
      %25 = sbr.rel (0) target = $region5
    $region4: #{seq2seq_forward.1} parent=1 // pred_region
      _
    $region5: #{seq2seq_forward.1} parent=1 // pred_fallthru
      _
    // Predicated region
    $region6: #{seq2seq_forward.1} parent=1 // pred_check
      _
    $region7: #{seq2seq_forward.1} parent=1 // pred_check_branch
      %27 = sbr.rel (0) target = $region9
    $region8: #{seq2seq_forward.1} parent=1 // pred_region
      _
    $region9: #{seq2seq_forward.1} parent=1 // pred_fallthru
      _
    // Predicated region
    $region10: #{seq2seq_forward.1} parent=1 // pred_check
      _
    $region11: #{seq2seq_forward.1} parent=1 // pred_check_branch
      %29 = sbr.rel (0) target = $region13
    $region12: #{seq2seq_forward.1} parent=1 // pred_region
      _
    $region13: #{seq2seq_forward.1} parent=1 // pred_fallthru
      _
    // Predicated region
    $region14: #{seq2seq_forward.1} parent=1 // pred_check
      _
    $region15: #{seq2seq_forward.1} parent=1 // pred_check_branch
      %31 = sbr.rel (0) target = $region17
    $region16: #{seq2seq_forward.1} parent=1 // pred_region
      _
    $region17: #{seq2seq_forward.1} parent=1 // pred_fallthru
      _
    // Predicated region
    $region18: #{seq2seq_forward.1} parent=1 // pred_check
      _
    $region19: #{seq2seq_forward.1} parent=1 // pred_check_branch
      %33 = sbr.rel (0) target = $region21
    $region20: #{seq2seq_forward.1} parent=1 // pred_region
      _
    $region21: #{seq2seq_forward.1} parent=1 // pred_fallthru
      _
    // Predicated region
    $region22: #{seq2seq_forward.1} parent=1 // pred_check
      _
    $region23: #{seq2seq_forward.1} parent=1 // pred_check_branch
      %35 = sbr.rel (0) target = $region25
    $region24: #{seq2seq_forward.1} parent=1 // pred_region
      _
    $region25: #{seq2seq_forward.1} parent=1 // pred_fallthru
      _
    // Predicated region
    $region26: #{seq2seq_forward.1} parent=1 // pred_check
      _
    $region27: #{seq2seq_forward.1} parent=1 // pred_check_branch
      %37 = sbr.rel (0) target = $region29
    $region28: #{seq2seq_forward.1} parent=1 // pred_region
      _
    $region29: #{seq2seq_forward.1} parent=1 // pred_fallthru
      _
    // Predicated region
    $region30: #{seq2seq_forward.1} parent=1 // pred_check
      _
    $region31: #{seq2seq_forward.1} parent=1 // pred_check_branch
      %39 = sbr.rel (0) target = $region33
    $region32: #{seq2seq_forward.1} parent=1 // pred_region
      _
    $region33: #{seq2seq_forward.1} parent=1 // pred_fallthru
      _
    // Predicated region
    $region34: #{seq2seq_forward.1} parent=1 // pred_check
      _
    $region35: #{seq2seq_forward.1} parent=1 // pred_check_branch
      %41 = sbr.rel (0) target = $region37
    $region36: #{seq2seq_forward.1} parent=1 // pred_region
      _
    $region37: #{seq2seq_forward.1} parent=1 // pred_fallthru
      _
    // Predicated region
    $region38: #{seq2seq_forward.1} parent=1 // pred_check
      _
    $region39: #{seq2seq_forward.1} parent=1 // pred_check_branch
      %43 = sbr.rel (0) target = $region41
    $region40: #{seq2seq_forward.1} parent=1 // pred_region
      _
    $region41: #{seq2seq_forward.1} parent=1 // pred_fallthru
      _
    // Predicated region
    $region42: #{seq2seq_forward.1} parent=1 // pred_check
      _
    $region43: #{seq2seq_forward.1} parent=1 // pred_check_branch
      %45 = sbr.rel (0) target = $region45
    $region44: #{seq2seq_forward.1} parent=1 // pred_region
      _
    $region45: #{seq2seq_forward.1} parent=1 // pred_fallthru
      _
    // Predicated region
    $region46: #{seq2seq_forward.1} parent=1 // pred_check
      _
    $region47: #{seq2seq_forward.1} parent=1 // pred_check_branch
      %47 = sbr.rel (0) target = $region49
    $region48: #{seq2seq_forward.1} parent=1 // pred_region
      _
    $region49: #{seq2seq_forward.1} parent=1 // pred_fallthru
      _
    // Predicated region
    $region50: #{seq2seq_forward.1} parent=1 // pred_check
      _
    $region51: #{seq2seq_forward.1} parent=1 // pred_check_branch
      %49 = sbr.rel (0) target = $region53
    $region52: #{seq2seq_forward.1} parent=1 // pred_region
      _
    $region53: #{seq2seq_forward.1} parent=1 // pred_fallthru
      _
    // Predicated region
    $region54: #{seq2seq_forward.1} parent=1 // pred_check
      _
    $region55: #{seq2seq_forward.1} parent=1 // pred_check_branch
      %51 = sbr.rel (0) target = $region57
    $region56: #{seq2seq_forward.1} parent=1 // pred_region
      _
    $region57: #{seq2seq_forward.1} parent=1 // pred_fallthru
      _
    // Predicated region
    $region58: #{seq2seq_forward.1} parent=1 // pred_check
      _
    $region59: #{seq2seq_forward.1} parent=1 // pred_check_branch
      %53 = sbr.rel (0) target = $region61
    $region60: #{seq2seq_forward.1} parent=1 // pred_region
      _
    $region61: #{seq2seq_forward.1} parent=1 // pred_fallthru
      _
    // Predicated region
    $region62: #{seq2seq_forward.1} parent=1 // pred_check
      _
    $region63: #{seq2seq_forward.1} parent=1 // pred_check_branch
      %55 = sbr.rel (0) target = $region65
    $region64: #{seq2seq_forward.1} parent=1 // pred_region
      _
    $region65: #{seq2seq_forward.1} parent=1 // pred_fallthru
      _
    // Predicated region
    $region66: #{seq2seq_forward.1} parent=1 // pred_check
      _
    $region67: #{seq2seq_forward.1} parent=1 // pred_check_branch
      %57 = sbr.rel (0) target = $region69
    $region68: #{seq2seq_forward.1} parent=1 // pred_region
      _
    $region69: #{seq2seq_forward.1} parent=1 // pred_fallthru
      _
    // Predicated region
    $region70: #{seq2seq_forward.1} parent=1 // pred_check
      _
    $region71: #{seq2seq_forward.1} parent=1 // pred_check_branch
      %59 = sbr.rel (0) target = $region73
    $region72: #{seq2seq_forward.1} parent=1 // pred_region
      _
    $region73: #{seq2seq_forward.1} parent=1 // pred_fallthru
      _
    %v60 = vld [vmem:[%s4] sm:$0xff]
    %v61 = vld [vmem:[%s4 + $0x8] sm:$0xff]
    %v62 = vld [vmem:[%s4 + $0x10] sm:$0xff]
    %v63 = vld [vmem:[%s4 + $0x18] sm:$0xff]
    %v64 = vld [vmem:[%s5] sm:$0xff]
    %v65 = vld [vmem:[%s5 + $0x8] sm:$0xff]
    %v66 = vld [vmem:[%s5 + $0x10] sm:$0xff]
    %v67 = vld [vmem:[%s5 + $0x18] sm:$0xff]
    %v68 = vld [vmem:[%s11] sm:$0xff]
    %v69 = vld [vmem:[%s11 + $0x8] sm:$0xff]
    %v70 = vld [vmem:[%s11 + $0x10] sm:$0xff]
    %v71 = vld [vmem:[%s11 + $0x18] sm:$0xff]
    %v72 = vld [vmem:[%s12] sm:$0xff]
    %v73 = vld [vmem:[%s12 + $0x8] sm:$0xff]
    %v74 = vld [vmem:[%s12 + $0x10] sm:$0xff]
    %v75 = vld [vmem:[%s12 + $0x18] sm:$0xff]
    %v76 = vld [vmem:[%s8] sm:$0x1]
    %v78 = vperm.slane %v76, 0
    %v80 = vld [vmem:[%s15] sm:$0x1]
    %v82 = vperm.slane %v80, 0
    %v84 = vld [vmem:[%s0] sm:$0xff]
    %v85 = vld [vmem:[%s0 + $0x8] sm:$0xff]
    %v86 = vld [vmem:[%s0 + $0x10] sm:$0xff]
    %v87 = vld [vmem:[%s0 + $0x18] sm:$0xff]
    %v88 = vld [vmem:[%s0 + $0x20] sm:$0xff]
    %v89 = vld [vmem:[%s0 + $0x28] sm:$0xff]
    %v90 = vld [vmem:[%s0 + $0x30] sm:$0xff]
    %v91 = vld [vmem:[%s0 + $0x38] sm:$0xff]
    %v92 = vld [vmem:[%s2] sm:$0xff]
    %v93 = vld [vmem:[%s2 + $0x8] sm:$0xff]
    %v94 = vld [vmem:[%s6] sm:$0x1]
    %v96 = vperm.slane %v94, 0
    %vm98 = vcmask 130048
    %v100 = vsel %vm98, %v84, 0
    %v103 = vsel %vm98, %v85, 0
    %v106 = vsel %vm98, %v86, 0
    %v109 = vsel %vm98, %v87, 0
    %v112 = vsel %vm98, %v88, 0
    %v115 = vsel %vm98, %v89, 0
    %v118 = vsel %vm98, %v90, 0
    %v121 = vsel %vm98, %v91, 0
    %123 = vmatpush.msra.mxu0 0.0
    %124 = vmatpush.msra.mxu0 0.0
    %125 = vmatpush.msra.mxu0 0.0
    %126 = vmatpush.msra.mxu0 0.0
    %127 = vmatpush.msra.mxu0 0.0
    %128 = vmatpush.msra.mxu0 0.0
    %129 = vmatpush.msra.mxu0 0.0
    %130 = vmatpush.msra.mxu0 0.0
    %131 = vmatpush.msra.mxu0 0.0
    %132 = vmatpush.msra.mxu0 0.0
    %133 = vmatpush.msra.mxu0 0.0
    %134 = vmatpush.msra.mxu0 0.0
    %135 = vmatpush.msra.mxu0 0.0
    %136 = vmatpush.msra.mxu0 0.0
    %137 = vmatpush.msra.mxu0 %v93
    %138 = vmatpush.msra.mxu0 %v92
    %139 = vmatmul.f32.gmra.mxu0 %v100
    %v140 = vpop.f32.mrf.mxu0
    %v141 = vadd.f32 %v96, %v140
    %142 = vmatmul.f32.gmra.mxu0 %v103
    %v143 = vpop.f32.mrf.mxu0
    %v144 = vadd.f32 %v96, %v143
    %145 = vmatmul.f32.gmra.mxu0 %v106
    %v146 = vpop.f32.mrf.mxu0
    %v147 = vadd.f32 %v96, %v146
    %148 = vmatmul.f32.gmra.mxu0 %v109
    %v149 = vpop.f32.mrf.mxu0
    %v150 = vadd.f32 %v96, %v149
    %151 = vmatmul.f32.gmra.mxu0 %v112
    %v152 = vpop.f32.mrf.mxu0
    %v153 = vadd.f32 %v96, %v152
    %154 = vmatmul.f32.gmra.mxu0 %v115
    %v155 = vpop.f32.mrf.mxu0
    %v156 = vadd.f32 %v96, %v155
    %157 = vmatmul.f32.gmra.mxu0 %v118
    %v158 = vpop.f32.mrf.mxu0
    %v159 = vadd.f32 %v96, %v158
    %160 = vmatmul.f32.gmra.mxu0 %v121
    %v161 = vpop.f32.mrf.mxu0
    %v162 = vadd.f32 %v96, %v161
    %163 = vdwg.mxu0
    %v164 = vld [vmem:[%s3] sm:$0xff]
    %v165 = vld [vmem:[%s3 + $0x8] sm:$0xff]
    %v166 = vld [vmem:[%s7] sm:$0x1]
    %v168 = vperm.slane %v166, 0
    %170 = vmatpush.msra.mxu0 0.0
    %171 = vmatpush.msra.mxu0 0.0
    %172 = vmatpush.msra.mxu0 0.0
    %173 = vmatpush.msra.mxu0 0.0
    %174 = vmatpush.msra.mxu0 0.0
    %175 = vmatpush.msra.mxu0 0.0
    %176 = vmatpush.msra.mxu0 0.0
    %177 = vmatpush.msra.mxu0 0.0
    %178 = vmatpush.msra.mxu0 0.0
    %179 = vmatpush.msra.mxu0 0.0
    %180 = vmatpush.msra.mxu0 0.0
    %181 = vmatpush.msra.mxu0 0.0
    %182 = vmatpush.msra.mxu0 0.0
    %183 = vmatpush.msra.mxu0 0.0
    %184 = vmatpush.msra.mxu0 %v165
    %185 = vmatpush.msra.mxu0 %v164
    %186 = vmatmul.f32.gmra.mxu0 %v100
    %v187 = vpop.f32.mrf.mxu0
    %v188 = vadd.f32 %v168, %v187
    %189 = vmatmul.f32.gmra.mxu0 %v103
    %v190 = vpop.f32.mrf.mxu0
    %v191 = vadd.f32 %v168, %v190
    %192 = vmatmul.f32.gmra.mxu0 %v106
    %v193 = vpop.f32.mrf.mxu0
    %v194 = vadd.f32 %v168, %v193
    %195 = vmatmul.f32.gmra.mxu0 %v109
    %v196 = vpop.f32.mrf.mxu0
    %v197 = vadd.f32 %v168, %v196
    %198 = vmatmul.f32.gmra.mxu0 %v112
    %v199 = vpop.f32.mrf.mxu0
    %v200 = vadd.f32 %v168, %v199
    %201 = vmatmul.f32.gmra.mxu0 %v115
    %v202 = vpop.f32.mrf.mxu0
    %v203 = vadd.f32 %v168, %v202
    %204 = vmatmul.f32.gmra.mxu0 %v118
    %v205 = vpop.f32.mrf.mxu0
    %v206 = vadd.f32 %v168, %v205
    %207 = vmatmul.f32.gmra.mxu0 %v121
    %v208 = vpop.f32.mrf.mxu0
    %v209 = vadd.f32 %v168, %v208
    %210 = vdwg.mxu0
    %v211 = vld [vmem:[%s1] sm:$0xff]
    %v212 = vld [vmem:[%s1 + $0x8] sm:$0xff]
    %v213 = vld [vmem:[%s1 + $0x10] sm:$0xff]
    %v214 = vld [vmem:[%s1 + $0x18] sm:$0xff]
    %v215 = vld [vmem:[%s1 + $0x20] sm:$0xff]
    %v216 = vld [vmem:[%s1 + $0x28] sm:$0xff]
    %v217 = vld [vmem:[%s1 + $0x30] sm:$0xff]
    %v218 = vld [vmem:[%s1 + $0x38] sm:$0xff]
    %v219 = vld [vmem:[%s9] sm:$0xff]
    %v220 = vld [vmem:[%s13] sm:$0x1]
    %v222 = vperm.slane %v220, 0
    %vm224 = vcmask 64512
    %v226 = vsel %vm224, %v211, 0
    %v229 = vsel %vm224, %v212, 0
    %v232 = vsel %vm224, %v213, 0
    %v235 = vsel %vm224, %v214, 0
    %v238 = vsel %vm224, %v215, 0
    %v241 = vsel %vm224, %v216, 0
    %v244 = vsel %vm224, %v217, 0
    %v247 = vsel %vm224, %v218, 0
    %249 = vmatpush.msra.mxu0 0.0
    %250 = vmatpush.msra.mxu0 0.0
    %251 = vmatpush.msra.mxu0 0.0
    %252 = vmatpush.msra.mxu0 0.0
    %253 = vmatpush.msra.mxu0 0.0
    %254 = vmatpush.msra.mxu0 0.0
    %255 = vmatpush.msra.mxu0 0.0
    %256 = vmatpush.msra.mxu0 0.0
    %257 = vmatpush.msra.mxu0 0.0
    %258 = vmatpush.msra.mxu0 0.0
    %259 = vmatpush.msra.mxu0 0.0
    %260 = vmatpush.msra.mxu0 0.0
    %261 = vmatpush.msra.mxu0 0.0
    %262 = vmatpush.msra.mxu0 0.0
    %263 = vmatpush.msra.mxu0 0.0
    %264 = vmatpush.msra.mxu0 %v219
    %265 = vmatmul.f32.gmra.mxu0 %v226
    %v266 = vpop.f32.mrf.mxu0
    %v267 = vadd.f32 %v222, %v266
    %268 = vmatmul.f32.gmra.mxu0 %v229
    %v269 = vpop.f32.mrf.mxu0
    %v270 = vadd.f32 %v222, %v269
    %271 = vmatmul.f32.gmra.mxu0 %v232
    %v272 = vpop.f32.mrf.mxu0
    %v273 = vadd.f32 %v222, %v272
    %274 = vmatmul.f32.gmra.mxu0 %v235
    %v275 = vpop.f32.mrf.mxu0
    %v276 = vadd.f32 %v222, %v275
    %277 = vmatmul.f32.gmra.mxu0 %v238
    %v278 = vpop.f32.mrf.mxu0
    %v279 = vadd.f32 %v222, %v278
    %280 = vmatmul.f32.gmra.mxu0 %v241
    %v281 = vpop.f32.mrf.mxu0
    %v282 = vadd.f32 %v222, %v281
    %283 = vmatmul.f32.gmra.mxu0 %v244
    %v284 = vpop.f32.mrf.mxu0
    %v285 = vadd.f32 %v222, %v284
    %286 = vmatmul.f32.gmra.mxu0 %v247
    %v287 = vpop.f32.mrf.mxu0
    %v288 = vadd.f32 %v222, %v287
    %289 = vdwg.mxu0
    %v290 = vld [vmem:[%s10] sm:$0xff]
    %v291 = vld [vmem:[%s14] sm:$0x1]
    %v293 = vperm.slane %v291, 0
    %295 = vmatpush.msra.mxu0 0.0
    %296 = vmatpush.msra.mxu0 0.0
    %297 = vmatpush.msra.mxu0 0.0
    %298 = vmatpush.msra.mxu0 0.0
    %299 = vmatpush.msra.mxu0 0.0
    %300 = vmatpush.msra.mxu0 0.0
    %301 = vmatpush.msra.mxu0 0.0
    %302 = vmatpush.msra.mxu0 0.0
    %303 = vmatpush.msra.mxu0 0.0
    %304 = vmatpush.msra.mxu0 0.0
    %305 = vmatpush.msra.mxu0 0.0
    %306 = vmatpush.msra.mxu0 0.0
    %307 = vmatpush.msra.mxu0 0.0
    %308 = vmatpush.msra.mxu0 0.0
    %309 = vmatpush.msra.mxu0 0.0
    %310 = vmatpush.msra.mxu0 %v290
    %311 = vmatmul.f32.gmra.mxu0 %v226
    %v312 = vpop.f32.mrf.mxu0
    %v313 = vadd.f32 %v293, %v312
    %314 = vmatmul.f32.gmra.mxu0 %v229
    %v315 = vpop.f32.mrf.mxu0
    %v316 = vadd.f32 %v293, %v315
    %317 = vmatmul.f32.gmra.mxu0 %v232
    %v318 = vpop.f32.mrf.mxu0
    %v319 = vadd.f32 %v293, %v318
    %320 = vmatmul.f32.gmra.mxu0 %v235
    %v321 = vpop.f32.mrf.mxu0
    %v322 = vadd.f32 %v293, %v321
    %323 = vmatmul.f32.gmra.mxu0 %v238
    %v324 = vpop.f32.mrf.mxu0
    %v325 = vadd.f32 %v293, %v324
    %326 = vmatmul.f32.gmra.mxu0 %v241
    %v327 = vpop.f32.mrf.mxu0
    %v328 = vadd.f32 %v293, %v327
    %329 = vmatmul.f32.gmra.mxu0 %v244
    %v330 = vpop.f32.mrf.mxu0
    %v331 = vadd.f32 %v293, %v330
    %332 = vmatmul.f32.gmra.mxu0 %v247
    %v333 = vpop.f32.mrf.mxu0
    %v334 = vadd.f32 %v293, %v333
    %335 = vdwg.mxu0
    %vm336 = vcmask 261120
    %v338 = vsel %vm336, 0.0, 0
    %340 = vmatpush.msra.mxu0 0.0
    %341 = vmatpush.msra.mxu0 0.0
    %342 = vmatpush.msra.mxu0 0.0
    %343 = vmatpush.msra.mxu0 0.0
    %344 = vmatpush.msra.mxu0 0.0
    %345 = vmatpush.msra.mxu0 0.0
    %346 = vmatpush.msra.mxu0 0.0
    %347 = vmatpush.msra.mxu0 0.0
    %348 = vmatpush.msra.mxu0 0.0
    %349 = vmatpush.msra.mxu0 0.0
    %350 = vmatpush.msra.mxu0 0.0
    %351 = vmatpush.msra.mxu0 0.0
    %352 = vmatpush.msra.mxu0 %v63
    %353 = vmatpush.msra.mxu0 %v62
    %354 = vmatpush.msra.mxu0 %v61
    %355 = vmatpush.msra.mxu0 %v60
    %356 = vmatmul.f32.gmra.mxu0 %v338
    %v357 = vpop.f32.mrf.mxu0
    %v358 = vadd.f32 0.0, %v357
    %359 = vdwg.mxu0
    %v360 = vadd.f32 %v141, %v358
    %v361 = vxor.u32 %v360, 2147483648
    %v362 = vmul.f32 %v361, 1.442695
    %v363 = vpow.pop %v362
    %v364 = vadd.f32 %v363, 1.0
    %v365 = vrcp.pop %v364
    %v366 = vmul.f32 %v364, %v365
    %v367 = vsub.f32 1.0, %v366
    %v368 = vmul.f32 %v365, %v367
    %v369 = vadd.f32 %v365, %v368
    %vm370 = vweird.f32 %v364
    %vm371 = vweird.f32 %v365
    %vm372 = vmor %vm370, %vm371
    %v373 = vsel %vm372, %v365, %v369
    %v374 = vand.u32 2147483647, %v364
    %vm375 = vcmp.eq.f32.partialorder %v374, 8.507059e+37
    %v376 = vand.u32 %v364, 2147483648
    %v377 = vor.u32 1.1754944e-38, %v376
    %v378 = vsel %vm375, %v377, %v373
    %v379 = vmul.f32 1.0, %v378
    %380 = vmatpush.msra.mxu0 0.0
    %381 = vmatpush.msra.mxu0 0.0
    %382 = vmatpush.msra.mxu0 0.0
    %383 = vmatpush.msra.mxu0 0.0
    %384 = vmatpush.msra.mxu0 0.0
    %385 = vmatpush.msra.mxu0 0.0
    %386 = vmatpush.msra.mxu0 0.0
    %387 = vmatpush.msra.mxu0 0.0
    %388 = vmatpush.msra.mxu0 0.0
    %389 = vmatpush.msra.mxu0 0.0
    %390 = vmatpush.msra.mxu0 0.0
    %391 = vmatpush.msra.mxu0 0.0
    %392 = vmatpush.msra.mxu0 %v67
    %393 = vmatpush.msra.mxu0 %v66
    %394 = vmatpush.msra.mxu0 %v65
    %395 = vmatpush.msra.mxu0 %v64
    %396 = vmatmul.f32.gmra.mxu0 %v338
    %v397 = vpop.f32.mrf.mxu0
    %v398 = vadd.f32 %v78, %v397
    %399 = vdwg.mxu0
    %v400 = vmul.f32 %v379, %v398
    %v401 = vadd.f32 %v188, %v400
    %v402 = vtanh.pop %v401
    %v403 = vsub.f32 0.0, %v402
    %405 = vrot.lane.b32.xlu0 %v403, 32
    %v406 = vpop.permute.xlu0 %405
    %v408 = vmul.f32 %v379, %v406
    %410 = vrot.lane.b32.xlu0 %v408, 96
    %v411 = vpop.permute.xlu0 %410
    %v413 = vadd.f32 %v402, %v411
    %v415 = vsel %vm336, %v413, 0
    %417 = vmatpush.msra.mxu0 0.0
    %418 = vmatpush.msra.mxu0 0.0
    %419 = vmatpush.msra.mxu0 0.0
    %420 = vmatpush.msra.mxu0 0.0
    %421 = vmatpush.msra.mxu0 0.0
    %422 = vmatpush.msra.mxu0 0.0
    %423 = vmatpush.msra.mxu0 0.0
    %424 = vmatpush.msra.mxu0 0.0
    %425 = vmatpush.msra.mxu0 0.0
    %426 = vmatpush.msra.mxu0 0.0
    %427 = vmatpush.msra.mxu0 0.0
    %428 = vmatpush.msra.mxu0 0.0
    %429 = vmatpush.msra.mxu0 %v63
    %430 = vmatpush.msra.mxu0 %v62
    %431 = vmatpush.msra.mxu0 %v61
    %432 = vmatpush.msra.mxu0 %v60
    %433 = vmatmul.f32.gmra.mxu0 %v415
    %v434 = vpop.f32.mrf.mxu0
    %v435 = vadd.f32 0.0, %v434
    %436 = vdwg.mxu0
    %v437 = vadd.f32 %v144, %v435
    %v438 = vxor.u32 %v437, 2147483648
    %v439 = vmul.f32 %v438, 1.442695
    %v440 = vpow.pop %v439
    %v441 = vadd.f32 %v440, 1.0
    %v442 = vrcp.pop %v441
    %v443 = vmul.f32 %v441, %v442
    %v444 = vsub.f32 1.0, %v443
    %v445 = vmul.f32 %v442, %v444
    %v446 = vadd.f32 %v442, %v445
    %vm447 = vweird.f32 %v441
    %vm448 = vweird.f32 %v442
    %vm449 = vmor %vm447, %vm448
    %v450 = vsel %vm449, %v442, %v446
    %v451 = vand.u32 2147483647, %v441
    %vm452 = vcmp.eq.f32.partialorder %v451, 8.507059e+37
    %v453 = vand.u32 %v441, 2147483648
    %v454 = vor.u32 1.1754944e-38, %v453
    %v455 = vsel %vm452, %v454, %v450
    %v456 = vmul.f32 1.0, %v455
    %457 = vmatpush.msra.mxu0 0.0
    %458 = vmatpush.msra.mxu0 0.0
    %459 = vmatpush.msra.mxu0 0.0
    %460 = vmatpush.msra.mxu0 0.0
    %461 = vmatpush.msra.mxu0 0.0
    %462 = vmatpush.msra.mxu0 0.0
    %463 = vmatpush.msra.mxu0 0.0
    %464 = vmatpush.msra.mxu0 0.0
    %465 = vmatpush.msra.mxu0 0.0
    %466 = vmatpush.msra.mxu0 0.0
    %467 = vmatpush.msra.mxu0 0.0
    %468 = vmatpush.msra.mxu0 0.0
    %469 = vmatpush.msra.mxu0 %v67
    %470 = vmatpush.msra.mxu0 %v66
    %471 = vmatpush.msra.mxu0 %v65
    %472 = vmatpush.msra.mxu0 %v64
    %473 = vmatmul.f32.gmra.mxu0 %v415
    %v474 = vpop.f32.mrf.mxu0
    %v475 = vadd.f32 %v78, %v474
    %476 = vdwg.mxu0
    %v477 = vmul.f32 %v456, %v475
    %v478 = vadd.f32 %v191, %v477
    %v479 = vtanh.pop %v478
    %v480 = vsub.f32 %v413, %v479
    %482 = vrot.lane.b32.xlu0 %v480, 32
    %v483 = vpop.permute.xlu0 %482
    %v485 = vmul.f32 %v456, %v483
    %487 = vrot.lane.b32.xlu0 %v485, 96
    %v488 = vpop.permute.xlu0 %487
    %v490 = vadd.f32 %v479, %v488
    %v492 = vsel %vm336, %v490, 0
    %494 = vmatpush.msra.mxu0 0.0
    %495 = vmatpush.msra.mxu0 0.0
    %496 = vmatpush.msra.mxu0 0.0
    %497 = vmatpush.msra.mxu0 0.0
    %498 = vmatpush.msra.mxu0 0.0
    %499 = vmatpush.msra.mxu0 0.0
    %500 = vmatpush.msra.mxu0 0.0
    %501 = vmatpush.msra.mxu0 0.0
    %502 = vmatpush.msra.mxu0 0.0
    %503 = vmatpush.msra.mxu0 0.0
    %504 = vmatpush.msra.mxu0 0.0
    %505 = vmatpush.msra.mxu0 0.0
    %506 = vmatpush.msra.mxu0 %v63
    %507 = vmatpush.msra.mxu0 %v62
    %508 = vmatpush.msra.mxu0 %v61
    %509 = vmatpush.msra.mxu0 %v60
    %510 = vmatmul.f32.gmra.mxu0 %v492
    %v511 = vpop.f32.mrf.mxu0
    %v512 = vadd.f32 0.0, %v511
    %513 = vdwg.mxu0
    %v514 = vadd.f32 %v147, %v512
    %v515 = vxor.u32 %v514, 2147483648
    %v516 = vmul.f32 %v515, 1.442695
    %v517 = vpow.pop %v516
    %v518 = vadd.f32 %v517, 1.0
    %v519 = vrcp.pop %v518
    %v520 = vmul.f32 %v518, %v519
    %v521 = vsub.f32 1.0, %v520
    %v522 = vmul.f32 %v519, %v521
    %v523 = vadd.f32 %v519, %v522
    %vm524 = vweird.f32 %v518
    %vm525 = vweird.f32 %v519
    %vm526 = vmor %vm524, %vm525
    %v527 = vsel %vm526, %v519, %v523
    %v528 = vand.u32 2147483647, %v518
    %vm529 = vcmp.eq.f32.partialorder %v528, 8.507059e+37
    %v530 = vand.u32 %v518, 2147483648
    %v531 = vor.u32 1.1754944e-38, %v530
    %v532 = vsel %vm529, %v531, %v527
    %v533 = vmul.f32 1.0, %v532
    %534 = vmatpush.msra.mxu0 0.0
    %535 = vmatpush.msra.mxu0 0.0
    %536 = vmatpush.msra.mxu0 0.0
    %537 = vmatpush.msra.mxu0 0.0
    %538 = vmatpush.msra.mxu0 0.0
    %539 = vmatpush.msra.mxu0 0.0
    %540 = vmatpush.msra.mxu0 0.0
    %541 = vmatpush.msra.mxu0 0.0
    %542 = vmatpush.msra.mxu0 0.0
    %543 = vmatpush.msra.mxu0 0.0
    %544 = vmatpush.msra.mxu0 0.0
    %545 = vmatpush.msra.mxu0 0.0
    %546 = vmatpush.msra.mxu0 %v67
    %547 = vmatpush.msra.mxu0 %v66
    %548 = vmatpush.msra.mxu0 %v65
    %549 = vmatpush.msra.mxu0 %v64
    %550 = vmatmul.f32.gmra.mxu0 %v492
    %v551 = vpop.f32.mrf.mxu0
    %v552 = vadd.f32 %v78, %v551
    %553 = vdwg.mxu0
    %v554 = vmul.f32 %v533, %v552
    %v555 = vadd.f32 %v194, %v554
    %v556 = vtanh.pop %v555
    %v557 = vsub.f32 %v490, %v556
    %559 = vrot.lane.b32.xlu0 %v557, 32
    %v560 = vpop.permute.xlu0 %559
    %v562 = vmul.f32 %v533, %v560
    %564 = vrot.lane.b32.xlu0 %v562, 96
    %v565 = vpop.permute.xlu0 %564
    %v567 = vadd.f32 %v556, %v565
    %v569 = vsel %vm336, %v567, 0
    %571 = vmatpush.msra.mxu0 0.0
    %572 = vmatpush.msra.mxu0 0.0
    %573 = vmatpush.msra.mxu0 0.0
    %574 = vmatpush.msra.mxu0 0.0
    %575 = vmatpush.msra.mxu0 0.0
    %576 = vmatpush.msra.mxu0 0.0
    %577 = vmatpush.msra.mxu0 0.0
    %578 = vmatpush.msra.mxu0 0.0
    %579 = vmatpush.msra.mxu0 0.0
    %580 = vmatpush.msra.mxu0 0.0
    %581 = vmatpush.msra.mxu0 0.0
    %582 = vmatpush.msra.mxu0 0.0
    %583 = vmatpush.msra.mxu0 %v63
    %584 = vmatpush.msra.mxu0 %v62
    %585 = vmatpush.msra.mxu0 %v61
    %586 = vmatpush.msra.mxu0 %v60
    %587 = vmatmul.f32.gmra.mxu0 %v569
    %v588 = vpop.f32.mrf.mxu0
    %v589 = vadd.f32 0.0, %v588
    %590 = vdwg.mxu0
    %v591 = vadd.f32 %v150, %v589
    %v592 = vxor.u32 %v591, 2147483648
    %v593 = vmul.f32 %v592, 1.442695
    %v594 = vpow.pop %v593
    %v595 = vadd.f32 %v594, 1.0
    %v596 = vrcp.pop %v595
    %v597 = vmul.f32 %v595, %v596
    %v598 = vsub.f32 1.0, %v597
    %v599 = vmul.f32 %v596, %v598
    %v600 = vadd.f32 %v596, %v599
    %vm601 = vweird.f32 %v595
    %vm602 = vweird.f32 %v596
    %vm603 = vmor %vm601, %vm602
    %v604 = vsel %vm603, %v596, %v600
    %v605 = vand.u32 2147483647, %v595
    %vm606 = vcmp.eq.f32.partialorder %v605, 8.507059e+37
    %v607 = vand.u32 %v595, 2147483648
    %v608 = vor.u32 1.1754944e-38, %v607
    %v609 = vsel %vm606, %v608, %v604
    %v610 = vmul.f32 1.0, %v609
    %611 = vmatpush.msra.mxu0 0.0
    %612 = vmatpush.msra.mxu0 0.0
    %613 = vmatpush.msra.mxu0 0.0
    %614 = vmatpush.msra.mxu0 0.0
    %615 = vmatpush.msra.mxu0 0.0
    %616 = vmatpush.msra.mxu0 0.0
    %617 = vmatpush.msra.mxu0 0.0
    %618 = vmatpush.msra.mxu0 0.0
    %619 = vmatpush.msra.mxu0 0.0
    %620 = vmatpush.msra.mxu0 0.0
    %621 = vmatpush.msra.mxu0 0.0
    %622 = vmatpush.msra.mxu0 0.0
    %623 = vmatpush.msra.mxu0 %v67
    %624 = vmatpush.msra.mxu0 %v66
    %625 = vmatpush.msra.mxu0 %v65
    %626 = vmatpush.msra.mxu0 %v64
    %627 = vmatmul.f32.gmra.mxu0 %v569
    %v628 = vpop.f32.mrf.mxu0
    %v629 = vadd.f32 %v78, %v628
    %630 = vdwg.mxu0
    %v631 = vmul.f32 %v610, %v629
    %v632 = vadd.f32 %v197, %v631
    %v633 = vtanh.pop %v632
    %v634 = vsub.f32 %v567, %v633
    %636 = vrot.lane.b32.xlu0 %v634, 32
    %v637 = vpop.permute.xlu0 %636
    %v639 = vmul.f32 %v610, %v637
    %641 = vrot.lane.b32.xlu0 %v639, 96
    %v642 = vpop.permute.xlu0 %641
    %v644 = vadd.f32 %v633, %v642
    %v646 = vsel %vm336, %v644, 0
    %648 = vmatpush.msra.mxu0 0.0
    %649 = vmatpush.msra.mxu0 0.0
    %650 = vmatpush.msra.mxu0 0.0
    %651 = vmatpush.msra.mxu0 0.0
    %652 = vmatpush.msra.mxu0 0.0
    %653 = vmatpush.msra.mxu0 0.0
    %654 = vmatpush.msra.mxu0 0.0
    %655 = vmatpush.msra.mxu0 0.0
    %656 = vmatpush.msra.mxu0 0.0
    %657 = vmatpush.msra.mxu0 0.0
    %658 = vmatpush.msra.mxu0 0.0
    %659 = vmatpush.msra.mxu0 0.0
    %660 = vmatpush.msra.mxu0 %v63
    %661 = vmatpush.msra.mxu0 %v62
    %662 = vmatpush.msra.mxu0 %v61
    %663 = vmatpush.msra.mxu0 %v60
    %664 = vmatmul.f32.gmra.mxu0 %v646
    %v665 = vpop.f32.mrf.mxu0
    %v666 = vadd.f32 0.0, %v665
    %667 = vdwg.mxu0
    %v668 = vadd.f32 %v153, %v666
    %v669 = vxor.u32 %v668, 2147483648
    %v670 = vmul.f32 %v669, 1.442695
    %v671 = vpow.pop %v670
    %v672 = vadd.f32 %v671, 1.0
    %v673 = vrcp.pop %v672
    %v674 = vmul.f32 %v672, %v673
    %v675 = vsub.f32 1.0, %v674
    %v676 = vmul.f32 %v673, %v675
    %v677 = vadd.f32 %v673, %v676
    %vm678 = vweird.f32 %v672
    %vm679 = vweird.f32 %v673
    %vm680 = vmor %vm678, %vm679
    %v681 = vsel %vm680, %v673, %v677
    %v682 = vand.u32 2147483647, %v672
    %vm683 = vcmp.eq.f32.partialorder %v682, 8.507059e+37
    %v684 = vand.u32 %v672, 2147483648
    %v685 = vor.u32 1.1754944e-38, %v684
    %v686 = vsel %vm683, %v685, %v681
    %v687 = vmul.f32 1.0, %v686
    %688 = vmatpush.msra.mxu0 0.0
    %689 = vmatpush.msra.mxu0 0.0
    %690 = vmatpush.msra.mxu0 0.0
    %691 = vmatpush.msra.mxu0 0.0
    %692 = vmatpush.msra.mxu0 0.0
    %693 = vmatpush.msra.mxu0 0.0
    %694 = vmatpush.msra.mxu0 0.0
    %695 = vmatpush.msra.mxu0 0.0
    %696 = vmatpush.msra.mxu0 0.0
    %697 = vmatpush.msra.mxu0 0.0
    %698 = vmatpush.msra.mxu0 0.0
    %699 = vmatpush.msra.mxu0 0.0
    %700 = vmatpush.msra.mxu0 %v67
    %701 = vmatpush.msra.mxu0 %v66
    %702 = vmatpush.msra.mxu0 %v65
    %703 = vmatpush.msra.mxu0 %v64
    %704 = vmatmul.f32.gmra.mxu0 %v646
    %v705 = vpop.f32.mrf.mxu0
    %v706 = vadd.f32 %v78, %v705
    %707 = vdwg.mxu0
    %v708 = vmul.f32 %v687, %v706
    %v709 = vadd.f32 %v200, %v708
    %v710 = vtanh.pop %v709
    %v711 = vsub.f32 %v644, %v710
    %713 = vrot.lane.b32.xlu0 %v711, 32
    %v714 = vpop.permute.xlu0 %713
    %v716 = vmul.f32 %v687, %v714
    %718 = vrot.lane.b32.xlu0 %v716, 96
    %v719 = vpop.permute.xlu0 %718
    %v721 = vadd.f32 %v710, %v719
    %v723 = vsel %vm336, %v721, 0
    %725 = vmatpush.msra.mxu0 0.0
    %726 = vmatpush.msra.mxu0 0.0
    %727 = vmatpush.msra.mxu0 0.0
    %728 = vmatpush.msra.mxu0 0.0
    %729 = vmatpush.msra.mxu0 0.0
    %730 = vmatpush.msra.mxu0 0.0
    %731 = vmatpush.msra.mxu0 0.0
    %732 = vmatpush.msra.mxu0 0.0
    %733 = vmatpush.msra.mxu0 0.0
    %734 = vmatpush.msra.mxu0 0.0
    %735 = vmatpush.msra.mxu0 0.0
    %736 = vmatpush.msra.mxu0 0.0
    %737 = vmatpush.msra.mxu0 %v63
    %738 = vmatpush.msra.mxu0 %v62
    %739 = vmatpush.msra.mxu0 %v61
    %740 = vmatpush.msra.mxu0 %v60
    %741 = vmatmul.f32.gmra.mxu0 %v723
    %v742 = vpop.f32.mrf.mxu0
    %v743 = vadd.f32 0.0, %v742
    %744 = vdwg.mxu0
    %v745 = vadd.f32 %v156, %v743
    %v746 = vxor.u32 %v745, 2147483648
    %v747 = vmul.f32 %v746, 1.442695
    %v748 = vpow.pop %v747
    %v749 = vadd.f32 %v748, 1.0
    %v750 = vrcp.pop %v749
    %v751 = vmul.f32 %v749, %v750
    %v752 = vsub.f32 1.0, %v751
    %v753 = vmul.f32 %v750, %v752
    %v754 = vadd.f32 %v750, %v753
    %vm755 = vweird.f32 %v749
    %vm756 = vweird.f32 %v750
    %vm757 = vmor %vm755, %vm756
    %v758 = vsel %vm757, %v750, %v754
    %v759 = vand.u32 2147483647, %v749
    %vm760 = vcmp.eq.f32.partialorder %v759, 8.507059e+37
    %v761 = vand.u32 %v749, 2147483648
    %v762 = vor.u32 1.1754944e-38, %v761
    %v763 = vsel %vm760, %v762, %v758
    %v764 = vmul.f32 1.0, %v763
    %765 = vmatpush.msra.mxu0 0.0
    %766 = vmatpush.msra.mxu0 0.0
    %767 = vmatpush.msra.mxu0 0.0
    %768 = vmatpush.msra.mxu0 0.0
    %769 = vmatpush.msra.mxu0 0.0
    %770 = vmatpush.msra.mxu0 0.0
    %771 = vmatpush.msra.mxu0 0.0
    %772 = vmatpush.msra.mxu0 0.0
    %773 = vmatpush.msra.mxu0 0.0
    %774 = vmatpush.msra.mxu0 0.0
    %775 = vmatpush.msra.mxu0 0.0
    %776 = vmatpush.msra.mxu0 0.0
    %777 = vmatpush.msra.mxu0 %v67
    %778 = vmatpush.msra.mxu0 %v66
    %779 = vmatpush.msra.mxu0 %v65
    %780 = vmatpush.msra.mxu0 %v64
    %781 = vmatmul.f32.gmra.mxu0 %v723
    %v782 = vpop.f32.mrf.mxu0
    %v783 = vadd.f32 %v78, %v782
    %784 = vdwg.mxu0
    %v785 = vmul.f32 %v764, %v783
    %v786 = vadd.f32 %v203, %v785
    %v787 = vtanh.pop %v786
    %v788 = vsub.f32 %v721, %v787
    %790 = vrot.lane.b32.xlu0 %v788, 32
    %v791 = vpop.permute.xlu0 %790
    %v793 = vmul.f32 %v764, %v791
    %795 = vrot.lane.b32.xlu0 %v793, 96
    %v796 = vpop.permute.xlu0 %795
    %v798 = vadd.f32 %v787, %v796
    %v800 = vsel %vm336, %v798, 0
    %802 = vmatpush.msra.mxu0 0.0
    %803 = vmatpush.msra.mxu0 0.0
    %804 = vmatpush.msra.mxu0 0.0
    %805 = vmatpush.msra.mxu0 0.0
    %806 = vmatpush.msra.mxu0 0.0
    %807 = vmatpush.msra.mxu0 0.0
    %808 = vmatpush.msra.mxu0 0.0
    %809 = vmatpush.msra.mxu0 0.0
    %810 = vmatpush.msra.mxu0 0.0
    %811 = vmatpush.msra.mxu0 0.0
    %812 = vmatpush.msra.mxu0 0.0
    %813 = vmatpush.msra.mxu0 0.0
    %814 = vmatpush.msra.mxu0 %v63
    %815 = vmatpush.msra.mxu0 %v62
    %816 = vmatpush.msra.mxu0 %v61
    %817 = vmatpush.msra.mxu0 %v60
    %818 = vmatmul.f32.gmra.mxu0 %v800
    %v819 = vpop.f32.mrf.mxu0
    %v820 = vadd.f32 0.0, %v819
    %821 = vdwg.mxu0
    %v822 = vadd.f32 %v159, %v820
    %v823 = vxor.u32 %v822, 2147483648
    %v824 = vmul.f32 %v823, 1.442695
    %v825 = vpow.pop %v824
    %v826 = vadd.f32 %v825, 1.0
    %v827 = vrcp.pop %v826
    %v828 = vmul.f32 %v826, %v827
    %v829 = vsub.f32 1.0, %v828
    %v830 = vmul.f32 %v827, %v829
    %v831 = vadd.f32 %v827, %v830
    %vm832 = vweird.f32 %v826
    %vm833 = vweird.f32 %v827
    %vm834 = vmor %vm832, %vm833
    %v835 = vsel %vm834, %v827, %v831
    %v836 = vand.u32 2147483647, %v826
    %vm837 = vcmp.eq.f32.partialorder %v836, 8.507059e+37
    %v838 = vand.u32 %v826, 2147483648
    %v839 = vor.u32 1.1754944e-38, %v838
    %v840 = vsel %vm837, %v839, %v835
    %v841 = vmul.f32 1.0, %v840
    %842 = vmatpush.msra.mxu0 0.0
    %843 = vmatpush.msra.mxu0 0.0
    %844 = vmatpush.msra.mxu0 0.0
    %845 = vmatpush.msra.mxu0 0.0
    %846 = vmatpush.msra.mxu0 0.0
    %847 = vmatpush.msra.mxu0 0.0
    %848 = vmatpush.msra.mxu0 0.0
    %849 = vmatpush.msra.mxu0 0.0
    %850 = vmatpush.msra.mxu0 0.0
    %851 = vmatpush.msra.mxu0 0.0
    %852 = vmatpush.msra.mxu0 0.0
    %853 = vmatpush.msra.mxu0 0.0
    %854 = vmatpush.msra.mxu0 %v67
    %855 = vmatpush.msra.mxu0 %v66
    %856 = vmatpush.msra.mxu0 %v65
    %857 = vmatpush.msra.mxu0 %v64
    %858 = vmatmul.f32.gmra.mxu0 %v800
    %v859 = vpop.f32.mrf.mxu0
    %v860 = vadd.f32 %v78, %v859
    %861 = vdwg.mxu0
    %v862 = vmul.f32 %v841, %v860
    %v863 = vadd.f32 %v206, %v862
    %v864 = vtanh.pop %v863
    %v865 = vsub.f32 %v798, %v864
    %867 = vrot.lane.b32.xlu0 %v865, 32
    %v868 = vpop.permute.xlu0 %867
    %v870 = vmul.f32 %v841, %v868
    %872 = vrot.lane.b32.xlu0 %v870, 96
    %v873 = vpop.permute.xlu0 %872
    %v875 = vadd.f32 %v864, %v873
    %v877 = vsel %vm336, %v875, 0
    %879 = vmatpush.msra.mxu0 0.0
    %880 = vmatpush.msra.mxu0 0.0
    %881 = vmatpush.msra.mxu0 0.0
    %882 = vmatpush.msra.mxu0 0.0
    %883 = vmatpush.msra.mxu0 0.0
    %884 = vmatpush.msra.mxu0 0.0
    %885 = vmatpush.msra.mxu0 0.0
    %886 = vmatpush.msra.mxu0 0.0
    %887 = vmatpush.msra.mxu0 0.0
    %888 = vmatpush.msra.mxu0 0.0
    %889 = vmatpush.msra.mxu0 0.0
    %890 = vmatpush.msra.mxu0 0.0
    %891 = vmatpush.msra.mxu0 %v63
    %892 = vmatpush.msra.mxu0 %v62
    %893 = vmatpush.msra.mxu0 %v61
    %894 = vmatpush.msra.mxu0 %v60
    %895 = vmatmul.f32.gmra.mxu0 %v877
    %v896 = vpop.f32.mrf.mxu0
    %v897 = vadd.f32 0.0, %v896
    %898 = vdwg.mxu0
    %v899 = vadd.f32 %v162, %v897
    %v900 = vxor.u32 %v899, 2147483648
    %v901 = vmul.f32 %v900, 1.442695
    %v902 = vpow.pop %v901
    %v903 = vadd.f32 %v902, 1.0
    %v904 = vrcp.pop %v903
    %v905 = vmul.f32 %v903, %v904
    %v906 = vsub.f32 1.0, %v905
    %v907 = vmul.f32 %v904, %v906
    %v908 = vadd.f32 %v904, %v907
    %vm909 = vweird.f32 %v903
    %vm910 = vweird.f32 %v904
    %vm911 = vmor %vm909, %vm910
    %v912 = vsel %vm911, %v904, %v908
    %v913 = vand.u32 2147483647, %v903
    %vm914 = vcmp.eq.f32.partialorder %v913, 8.507059e+37
    %v915 = vand.u32 %v903, 2147483648
    %v916 = vor.u32 1.1754944e-38, %v915
    %v917 = vsel %vm914, %v916, %v912
    %v918 = vmul.f32 1.0, %v917
    %919 = vmatpush.msra.mxu0 0.0
    %920 = vmatpush.msra.mxu0 0.0
    %921 = vmatpush.msra.mxu0 0.0
    %922 = vmatpush.msra.mxu0 0.0
    %923 = vmatpush.msra.mxu0 0.0
    %924 = vmatpush.msra.mxu0 0.0
    %925 = vmatpush.msra.mxu0 0.0
    %926 = vmatpush.msra.mxu0 0.0
    %927 = vmatpush.msra.mxu0 0.0
    %928 = vmatpush.msra.mxu0 0.0
    %929 = vmatpush.msra.mxu0 0.0
    %930 = vmatpush.msra.mxu0 0.0
    %931 = vmatpush.msra.mxu0 %v67
    %932 = vmatpush.msra.mxu0 %v66
    %933 = vmatpush.msra.mxu0 %v65
    %934 = vmatpush.msra.mxu0 %v64
    %935 = vmatmul.f32.gmra.mxu0 %v877
    %v936 = vpop.f32.mrf.mxu0
    %v937 = vadd.f32 %v78, %v936
    %938 = vdwg.mxu0
    %v939 = vmul.f32 %v918, %v937
    %v940 = vadd.f32 %v209, %v939
    %v941 = vtanh.pop %v940
    %v942 = vsub.f32 %v875, %v941
    %944 = vrot.lane.b32.xlu0 %v942, 32
    %v945 = vpop.permute.xlu0 %944
    %v947 = vmul.f32 %v918, %v945
    %949 = vrot.lane.b32.xlu0 %v947, 96
    %v950 = vpop.permute.xlu0 %949
    %v952 = vadd.f32 %v941, %v950
    %v954 = vsel %vm336, %v952, 0
    %956 = vmatpush.msra.mxu0 0.0
    %957 = vmatpush.msra.mxu0 0.0
    %958 = vmatpush.msra.mxu0 0.0
    %959 = vmatpush.msra.mxu0 0.0
    %960 = vmatpush.msra.mxu0 0.0
    %961 = vmatpush.msra.mxu0 0.0
    %962 = vmatpush.msra.mxu0 0.0
    %963 = vmatpush.msra.mxu0 0.0
    %964 = vmatpush.msra.mxu0 0.0
    %965 = vmatpush.msra.mxu0 0.0
    %966 = vmatpush.msra.mxu0 0.0
    %967 = vmatpush.msra.mxu0 0.0
    %968 = vmatpush.msra.mxu0 %v71
    %969 = vmatpush.msra.mxu0 %v70
    %970 = vmatpush.msra.mxu0 %v69
    %971 = vmatpush.msra.mxu0 %v68
    %972 = vmatmul.f32.gmra.mxu0 %v954
    %v973 = vpop.f32.mrf.mxu0
    %v974 = vadd.f32 0.0, %v973
    %975 = vdwg.mxu0
    %v976 = vadd.f32 %v267, %v974
    %v977 = vxor.u32 %v976, 2147483648
    %v978 = vmul.f32 %v977, 1.442695
    %v979 = vpow.pop %v978
    %v980 = vadd.f32 %v979, 1.0
    %v981 = vrcp.pop %v980
    %v982 = vmul.f32 %v980, %v981
    %v983 = vsub.f32 1.0, %v982
    %v984 = vmul.f32 %v981, %v983
    %v985 = vadd.f32 %v981, %v984
    %vm986 = vweird.f32 %v980
    %vm987 = vweird.f32 %v981
    %vm988 = vmor %vm986, %vm987
    %v989 = vsel %vm988, %v981, %v985
    %v990 = vand.u32 2147483647, %v980
    %vm991 = vcmp.eq.f32.partialorder %v990, 8.507059e+37
    %v992 = vand.u32 %v980, 2147483648
    %v993 = vor.u32 1.1754944e-38, %v992
    %v994 = vsel %vm991, %v993, %v989
    %v995 = vmul.f32 1.0, %v994
    %996 = vmatpush.msra.mxu0 0.0
    %997 = vmatpush.msra.mxu0 0.0
    %998 = vmatpush.msra.mxu0 0.0
    %999 = vmatpush.msra.mxu0 0.0
    %1000 = vmatpush.msra.mxu0 0.0
    %1001 = vmatpush.msra.mxu0 0.0
    %1002 = vmatpush.msra.mxu0 0.0
    %1003 = vmatpush.msra.mxu0 0.0
    %1004 = vmatpush.msra.mxu0 0.0
    %1005 = vmatpush.msra.mxu0 0.0
    %1006 = vmatpush.msra.mxu0 0.0
    %1007 = vmatpush.msra.mxu0 0.0
    %1008 = vmatpush.msra.mxu0 %v75
    %1009 = vmatpush.msra.mxu0 %v74
    %1010 = vmatpush.msra.mxu0 %v73
    %1011 = vmatpush.msra.mxu0 %v72
    %1012 = vmatmul.f32.gmra.mxu0 %v954
    %v1013 = vpop.f32.mrf.mxu0
    %v1014 = vadd.f32 %v82, %v1013
    %1015 = vdwg.mxu0
    %v1016 = vmul.f32 %v995, %v1014
    %v1017 = vadd.f32 %v313, %v1016
    %v1018 = vtanh.pop %v1017
    %v1019 = vsub.f32 %v952, %v1018
    %1021 = vrot.lane.b32.xlu0 %v1019, 32
    %v1022 = vpop.permute.xlu0 %1021
    %v1024 = vmul.f32 %v995, %v1022
    %1026 = vrot.lane.b32.xlu0 %v1024, 96
    %v1027 = vpop.permute.xlu0 %1026
    %v1029 = vadd.f32 %v1018, %v1027
    %v1031 = vsel %vm336, %v1029, 0
    %1033 = vmatpush.msra.mxu0 0.0
    %1034 = vmatpush.msra.mxu0 0.0
    %1035 = vmatpush.msra.mxu0 0.0
    %1036 = vmatpush.msra.mxu0 0.0
    %1037 = vmatpush.msra.mxu0 0.0
    %1038 = vmatpush.msra.mxu0 0.0
    %1039 = vmatpush.msra.mxu0 0.0
    %1040 = vmatpush.msra.mxu0 0.0
    %1041 = vmatpush.msra.mxu0 0.0
    %1042 = vmatpush.msra.mxu0 0.0
    %1043 = vmatpush.msra.mxu0 0.0
    %1044 = vmatpush.msra.mxu0 0.0
    %1045 = vmatpush.msra.mxu0 %v71
    %1046 = vmatpush.msra.mxu0 %v70
    %1047 = vmatpush.msra.mxu0 %v69
    %1048 = vmatpush.msra.mxu0 %v68
    %1049 = vmatmul.f32.gmra.mxu0 %v1031
    %v1050 = vpop.f32.mrf.mxu0
    %v1051 = vadd.f32 0.0, %v1050
    %1052 = vdwg.mxu0
    %v1053 = vadd.f32 %v270, %v1051
    %v1054 = vxor.u32 %v1053, 2147483648
    %v1055 = vmul.f32 %v1054, 1.442695
    %v1056 = vpow.pop %v1055
    %v1057 = vadd.f32 %v1056, 1.0
    %v1058 = vrcp.pop %v1057
    %v1059 = vmul.f32 %v1057, %v1058
    %v1060 = vsub.f32 1.0, %v1059
    %v1061 = vmul.f32 %v1058, %v1060
    %v1062 = vadd.f32 %v1058, %v1061
    %vm1063 = vweird.f32 %v1057
    %vm1064 = vweird.f32 %v1058
    %vm1065 = vmor %vm1063, %vm1064
    %v1066 = vsel %vm1065, %v1058, %v1062
    %v1067 = vand.u32 2147483647, %v1057
    %vm1068 = vcmp.eq.f32.partialorder %v1067, 8.507059e+37
    %v1069 = vand.u32 %v1057, 2147483648
    %v1070 = vor.u32 1.1754944e-38, %v1069
    %v1071 = vsel %vm1068, %v1070, %v1066
    %v1072 = vmul.f32 1.0, %v1071
    %1073 = vmatpush.msra.mxu0 0.0
    %1074 = vmatpush.msra.mxu0 0.0
    %1075 = vmatpush.msra.mxu0 0.0
    %1076 = vmatpush.msra.mxu0 0.0
    %1077 = vmatpush.msra.mxu0 0.0
    %1078 = vmatpush.msra.mxu0 0.0
    %1079 = vmatpush.msra.mxu0 0.0
    %1080 = vmatpush.msra.mxu0 0.0
    %1081 = vmatpush.msra.mxu0 0.0
    %1082 = vmatpush.msra.mxu0 0.0
    %1083 = vmatpush.msra.mxu0 0.0
    %1084 = vmatpush.msra.mxu0 0.0
    %1085 = vmatpush.msra.mxu0 %v75
    %1086 = vmatpush.msra.mxu0 %v74
    %1087 = vmatpush.msra.mxu0 %v73
    %1088 = vmatpush.msra.mxu0 %v72
    %1089 = vmatmul.f32.gmra.mxu0 %v1031
    %v1090 = vpop.f32.mrf.mxu0
    %v1091 = vadd.f32 %v82, %v1090
    %1092 = vdwg.mxu0
    %v1093 = vmul.f32 %v1072, %v1091
    %v1094 = vadd.f32 %v316, %v1093
    %v1095 = vtanh.pop %v1094
    %v1096 = vsub.f32 %v1029, %v1095
    %1098 = vrot.lane.b32.xlu0 %v1096, 32
    %v1099 = vpop.permute.xlu0 %1098
    %v1101 = vmul.f32 %v1072, %v1099
    %1103 = vrot.lane.b32.xlu0 %v1101, 96
    %v1104 = vpop.permute.xlu0 %1103
    %v1106 = vadd.f32 %v1095, %v1104
    %v1108 = vsel %vm336, %v1106, 0
    %1110 = vmatpush.msra.mxu0 0.0
    %1111 = vmatpush.msra.mxu0 0.0
    %1112 = vmatpush.msra.mxu0 0.0
    %1113 = vmatpush.msra.mxu0 0.0
    %1114 = vmatpush.msra.mxu0 0.0
    %1115 = vmatpush.msra.mxu0 0.0
    %1116 = vmatpush.msra.mxu0 0.0
    %1117 = vmatpush.msra.mxu0 0.0
    %1118 = vmatpush.msra.mxu0 0.0
    %1119 = vmatpush.msra.mxu0 0.0
    %1120 = vmatpush.msra.mxu0 0.0
    %1121 = vmatpush.msra.mxu0 0.0
    %1122 = vmatpush.msra.mxu0 %v71
    %1123 = vmatpush.msra.mxu0 %v70
    %1124 = vmatpush.msra.mxu0 %v69
    %1125 = vmatpush.msra.mxu0 %v68
    %1126 = vmatmul.f32.gmra.mxu0 %v1108
    %v1127 = vpop.f32.mrf.mxu0
    %v1128 = vadd.f32 0.0, %v1127
    %1129 = vdwg.mxu0
    %v1130 = vadd.f32 %v273, %v1128
    %v1131 = vxor.u32 %v1130, 2147483648
    %v1132 = vmul.f32 %v1131, 1.442695
    %v1133 = vpow.pop %v1132
    %v1134 = vadd.f32 %v1133, 1.0
    %v1135 = vrcp.pop %v1134
    %v1136 = vmul.f32 %v1134, %v1135
    %v1137 = vsub.f32 1.0, %v1136
    %v1138 = vmul.f32 %v1135, %v1137
    %v1139 = vadd.f32 %v1135, %v1138
    %vm1140 = vweird.f32 %v1134
    %vm1141 = vweird.f32 %v1135
    %vm1142 = vmor %vm1140, %vm1141
    %v1143 = vsel %vm1142, %v1135, %v1139
    %v1144 = vand.u32 2147483647, %v1134
    %vm1145 = vcmp.eq.f32.partialorder %v1144, 8.507059e+37
    %v1146 = vand.u32 %v1134, 2147483648
    %v1147 = vor.u32 1.1754944e-38, %v1146
    %v1148 = vsel %vm1145, %v1147, %v1143
    %v1149 = vmul.f32 1.0, %v1148
    %1150 = vmatpush.msra.mxu0 0.0
    %1151 = vmatpush.msra.mxu0 0.0
    %1152 = vmatpush.msra.mxu0 0.0
    %1153 = vmatpush.msra.mxu0 0.0
    %1154 = vmatpush.msra.mxu0 0.0
    %1155 = vmatpush.msra.mxu0 0.0
    %1156 = vmatpush.msra.mxu0 0.0
    %1157 = vmatpush.msra.mxu0 0.0
    %1158 = vmatpush.msra.mxu0 0.0
    %1159 = vmatpush.msra.mxu0 0.0
    %1160 = vmatpush.msra.mxu0 0.0
    %1161 = vmatpush.msra.mxu0 0.0
    %1162 = vmatpush.msra.mxu0 %v75
    %1163 = vmatpush.msra.mxu0 %v74
    %1164 = vmatpush.msra.mxu0 %v73
    %1165 = vmatpush.msra.mxu0 %v72
    %1166 = vmatmul.f32.gmra.mxu0 %v1108
    %v1167 = vpop.f32.mrf.mxu0
    %v1168 = vadd.f32 %v82, %v1167
    %1169 = vdwg.mxu0
    %v1170 = vmul.f32 %v1149, %v1168
    %v1171 = vadd.f32 %v319, %v1170
    %v1172 = vtanh.pop %v1171
    %v1173 = vsub.f32 %v1106, %v1172
    %1175 = vrot.lane.b32.xlu0 %v1173, 32
    %v1176 = vpop.permute.xlu0 %1175
    %v1178 = vmul.f32 %v1149, %v1176
    %1180 = vrot.lane.b32.xlu0 %v1178, 96
    %v1181 = vpop.permute.xlu0 %1180
    %v1183 = vadd.f32 %v1172, %v1181
    %v1185 = vsel %vm336, %v1183, 0
    %1187 = vmatpush.msra.mxu0 0.0
    %1188 = vmatpush.msra.mxu0 0.0
    %1189 = vmatpush.msra.mxu0 0.0
    %1190 = vmatpush.msra.mxu0 0.0
    %1191 = vmatpush.msra.mxu0 0.0
    %1192 = vmatpush.msra.mxu0 0.0
    %1193 = vmatpush.msra.mxu0 0.0
    %1194 = vmatpush.msra.mxu0 0.0
    %1195 = vmatpush.msra.mxu0 0.0
    %1196 = vmatpush.msra.mxu0 0.0
    %1197 = vmatpush.msra.mxu0 0.0
    %1198 = vmatpush.msra.mxu0 0.0
    %1199 = vmatpush.msra.mxu0 %v71
    %1200 = vmatpush.msra.mxu0 %v70
    %1201 = vmatpush.msra.mxu0 %v69
    %1202 = vmatpush.msra.mxu0 %v68
    %1203 = vmatmul.f32.gmra.mxu0 %v1185
    %v1204 = vpop.f32.mrf.mxu0
    %v1205 = vadd.f32 0.0, %v1204
    %1206 = vdwg.mxu0
    %v1207 = vadd.f32 %v276, %v1205
    %v1208 = vxor.u32 %v1207, 2147483648
    %v1209 = vmul.f32 %v1208, 1.442695
    %v1210 = vpow.pop %v1209
    %v1211 = vadd.f32 %v1210, 1.0
    %v1212 = vrcp.pop %v1211
    %v1213 = vmul.f32 %v1211, %v1212
    %v1214 = vsub.f32 1.0, %v1213
    %v1215 = vmul.f32 %v1212, %v1214
    %v1216 = vadd.f32 %v1212, %v1215
    %vm1217 = vweird.f32 %v1211
    %vm1218 = vweird.f32 %v1212
    %vm1219 = vmor %vm1217, %vm1218
    %v1220 = vsel %vm1219, %v1212, %v1216
    %v1221 = vand.u32 2147483647, %v1211
    %vm1222 = vcmp.eq.f32.partialorder %v1221, 8.507059e+37
    %v1223 = vand.u32 %v1211, 2147483648
    %v1224 = vor.u32 1.1754944e-38, %v1223
    %v1225 = vsel %vm1222, %v1224, %v1220
    %v1226 = vmul.f32 1.0, %v1225
    %1227 = vmatpush.msra.mxu0 0.0
    %1228 = vmatpush.msra.mxu0 0.0
    %1229 = vmatpush.msra.mxu0 0.0
    %1230 = vmatpush.msra.mxu0 0.0
    %1231 = vmatpush.msra.mxu0 0.0
    %1232 = vmatpush.msra.mxu0 0.0
    %1233 = vmatpush.msra.mxu0 0.0
    %1234 = vmatpush.msra.mxu0 0.0
    %1235 = vmatpush.msra.mxu0 0.0
    %1236 = vmatpush.msra.mxu0 0.0
    %1237 = vmatpush.msra.mxu0 0.0
    %1238 = vmatpush.msra.mxu0 0.0
    %1239 = vmatpush.msra.mxu0 %v75
    %1240 = vmatpush.msra.mxu0 %v74
    %1241 = vmatpush.msra.mxu0 %v73
    %1242 = vmatpush.msra.mxu0 %v72
    %1243 = vmatmul.f32.gmra.mxu0 %v1185
    %v1244 = vpop.f32.mrf.mxu0
    %v1245 = vadd.f32 %v82, %v1244
    %1246 = vdwg.mxu0
    %v1247 = vmul.f32 %v1226, %v1245
    %v1248 = vadd.f32 %v322, %v1247
    %v1249 = vtanh.pop %v1248
    %v1250 = vsub.f32 %v1183, %v1249
    %1252 = vrot.lane.b32.xlu0 %v1250, 32
    %v1253 = vpop.permute.xlu0 %1252
    %v1255 = vmul.f32 %v1226, %v1253
    %1257 = vrot.lane.b32.xlu0 %v1255, 96
    %v1258 = vpop.permute.xlu0 %1257
    %v1260 = vadd.f32 %v1249, %v1258
    %v1262 = vsel %vm336, %v1260, 0
    %1264 = vmatpush.msra.mxu0 0.0
    %1265 = vmatpush.msra.mxu0 0.0
    %1266 = vmatpush.msra.mxu0 0.0
    %1267 = vmatpush.msra.mxu0 0.0
    %1268 = vmatpush.msra.mxu0 0.0
    %1269 = vmatpush.msra.mxu0 0.0
    %1270 = vmatpush.msra.mxu0 0.0
    %1271 = vmatpush.msra.mxu0 0.0
    %1272 = vmatpush.msra.mxu0 0.0
    %1273 = vmatpush.msra.mxu0 0.0
    %1274 = vmatpush.msra.mxu0 0.0
    %1275 = vmatpush.msra.mxu0 0.0
    %1276 = vmatpush.msra.mxu0 %v71
    %1277 = vmatpush.msra.mxu0 %v70
    %1278 = vmatpush.msra.mxu0 %v69
    %1279 = vmatpush.msra.mxu0 %v68
    %1280 = vmatmul.f32.gmra.mxu0 %v1262
    %v1281 = vpop.f32.mrf.mxu0
    %v1282 = vadd.f32 0.0, %v1281
    %1283 = vdwg.mxu0
    %v1284 = vadd.f32 %v279, %v1282
    %v1285 = vxor.u32 %v1284, 2147483648
    %v1286 = vmul.f32 %v1285, 1.442695
    %v1287 = vpow.pop %v1286
    %v1288 = vadd.f32 %v1287, 1.0
    %v1289 = vrcp.pop %v1288
    %v1290 = vmul.f32 %v1288, %v1289
    %v1291 = vsub.f32 1.0, %v1290
    %v1292 = vmul.f32 %v1289, %v1291
    %v1293 = vadd.f32 %v1289, %v1292
    %vm1294 = vweird.f32 %v1288
    %vm1295 = vweird.f32 %v1289
    %vm1296 = vmor %vm1294, %vm1295
    %v1297 = vsel %vm1296, %v1289, %v1293
    %v1298 = vand.u32 2147483647, %v1288
    %vm1299 = vcmp.eq.f32.partialorder %v1298, 8.507059e+37
    %v1300 = vand.u32 %v1288, 2147483648
    %v1301 = vor.u32 1.1754944e-38, %v1300
    %v1302 = vsel %vm1299, %v1301, %v1297
    %v1303 = vmul.f32 1.0, %v1302
    %1304 = vmatpush.msra.mxu0 0.0
    %1305 = vmatpush.msra.mxu0 0.0
    %1306 = vmatpush.msra.mxu0 0.0
    %1307 = vmatpush.msra.mxu0 0.0
    %1308 = vmatpush.msra.mxu0 0.0
    %1309 = vmatpush.msra.mxu0 0.0
    %1310 = vmatpush.msra.mxu0 0.0
    %1311 = vmatpush.msra.mxu0 0.0
    %1312 = vmatpush.msra.mxu0 0.0
    %1313 = vmatpush.msra.mxu0 0.0
    %1314 = vmatpush.msra.mxu0 0.0
    %1315 = vmatpush.msra.mxu0 0.0
    %1316 = vmatpush.msra.mxu0 %v75
    %1317 = vmatpush.msra.mxu0 %v74
    %1318 = vmatpush.msra.mxu0 %v73
    %1319 = vmatpush.msra.mxu0 %v72
    %1320 = vmatmul.f32.gmra.mxu0 %v1262
    %v1321 = vpop.f32.mrf.mxu0
    %v1322 = vadd.f32 %v82, %v1321
    %1323 = vdwg.mxu0
    %v1324 = vmul.f32 %v1303, %v1322
    %v1325 = vadd.f32 %v325, %v1324
    %v1326 = vtanh.pop %v1325
    %v1327 = vsub.f32 %v1260, %v1326
    %1329 = vrot.lane.b32.xlu0 %v1327, 32
    %v1330 = vpop.permute.xlu0 %1329
    %v1332 = vmul.f32 %v1303, %v1330
    %1334 = vrot.lane.b32.xlu0 %v1332, 96
    %v1335 = vpop.permute.xlu0 %1334
    %v1337 = vadd.f32 %v1326, %v1335
    %v1339 = vsel %vm336, %v1337, 0
    %1341 = vmatpush.msra.mxu0 0.0
    %1342 = vmatpush.msra.mxu0 0.0
    %1343 = vmatpush.msra.mxu0 0.0
    %1344 = vmatpush.msra.mxu0 0.0
    %1345 = vmatpush.msra.mxu0 0.0
    %1346 = vmatpush.msra.mxu0 0.0
    %1347 = vmatpush.msra.mxu0 0.0
    %1348 = vmatpush.msra.mxu0 0.0
    %1349 = vmatpush.msra.mxu0 0.0
    %1350 = vmatpush.msra.mxu0 0.0
    %1351 = vmatpush.msra.mxu0 0.0
    %1352 = vmatpush.msra.mxu0 0.0
    %1353 = vmatpush.msra.mxu0 %v71
    %1354 = vmatpush.msra.mxu0 %v70
    %1355 = vmatpush.msra.mxu0 %v69
    %1356 = vmatpush.msra.mxu0 %v68
    %1357 = vmatmul.f32.gmra.mxu0 %v1339
    %v1358 = vpop.f32.mrf.mxu0
    %v1359 = vadd.f32 0.0, %v1358
    %1360 = vdwg.mxu0
    %v1361 = vadd.f32 %v282, %v1359
    %v1362 = vxor.u32 %v1361, 2147483648
    %v1363 = vmul.f32 %v1362, 1.442695
    %v1364 = vpow.pop %v1363
    %v1365 = vadd.f32 %v1364, 1.0
    %v1366 = vrcp.pop %v1365
    %v1367 = vmul.f32 %v1365, %v1366
    %v1368 = vsub.f32 1.0, %v1367
    %v1369 = vmul.f32 %v1366, %v1368
    %v1370 = vadd.f32 %v1366, %v1369
    %vm1371 = vweird.f32 %v1365
    %vm1372 = vweird.f32 %v1366
    %vm1373 = vmor %vm1371, %vm1372
    %v1374 = vsel %vm1373, %v1366, %v1370
    %v1375 = vand.u32 2147483647, %v1365
    %vm1376 = vcmp.eq.f32.partialorder %v1375, 8.507059e+37
    %v1377 = vand.u32 %v1365, 2147483648
    %v1378 = vor.u32 1.1754944e-38, %v1377
    %v1379 = vsel %vm1376, %v1378, %v1374
    %v1380 = vmul.f32 1.0, %v1379
    %1381 = vmatpush.msra.mxu0 0.0
    %1382 = vmatpush.msra.mxu0 0.0
    %1383 = vmatpush.msra.mxu0 0.0
    %1384 = vmatpush.msra.mxu0 0.0
    %1385 = vmatpush.msra.mxu0 0.0
    %1386 = vmatpush.msra.mxu0 0.0
    %1387 = vmatpush.msra.mxu0 0.0
    %1388 = vmatpush.msra.mxu0 0.0
    %1389 = vmatpush.msra.mxu0 0.0
    %1390 = vmatpush.msra.mxu0 0.0
    %1391 = vmatpush.msra.mxu0 0.0
    %1392 = vmatpush.msra.mxu0 0.0
    %1393 = vmatpush.msra.mxu0 %v75
    %1394 = vmatpush.msra.mxu0 %v74
    %1395 = vmatpush.msra.mxu0 %v73
    %1396 = vmatpush.msra.mxu0 %v72
    %1397 = vmatmul.f32.gmra.mxu0 %v1339
    %v1398 = vpop.f32.mrf.mxu0
    %v1399 = vadd.f32 %v82, %v1398
    %1400 = vdwg.mxu0
    %v1401 = vmul.f32 %v1380, %v1399
    %v1402 = vadd.f32 %v328, %v1401
    %v1403 = vtanh.pop %v1402
    %v1404 = vsub.f32 %v1337, %v1403
    %1406 = vrot.lane.b32.xlu0 %v1404, 32
    %v1407 = vpop.permute.xlu0 %1406
    %v1409 = vmul.f32 %v1380, %v1407
    %1411 = vrot.lane.b32.xlu0 %v1409, 96
    %v1412 = vpop.permute.xlu0 %1411
    %v1414 = vadd.f32 %v1403, %v1412
    %v1416 = vsel %vm336, %v1414, 0
    %1418 = vmatpush.msra.mxu0 0.0
    %1419 = vmatpush.msra.mxu0 0.0
    %1420 = vmatpush.msra.mxu0 0.0
    %1421 = vmatpush.msra.mxu0 0.0
    %1422 = vmatpush.msra.mxu0 0.0
    %1423 = vmatpush.msra.mxu0 0.0
    %1424 = vmatpush.msra.mxu0 0.0
    %1425 = vmatpush.msra.mxu0 0.0
    %1426 = vmatpush.msra.mxu0 0.0
    %1427 = vmatpush.msra.mxu0 0.0
    %1428 = vmatpush.msra.mxu0 0.0
    %1429 = vmatpush.msra.mxu0 0.0
    %1430 = vmatpush.msra.mxu0 %v71
    %1431 = vmatpush.msra.mxu0 %v70
    %1432 = vmatpush.msra.mxu0 %v69
    %1433 = vmatpush.msra.mxu0 %v68
    %1434 = vmatmul.f32.gmra.mxu0 %v1416
    %v1435 = vpop.f32.mrf.mxu0
    %v1436 = vadd.f32 0.0, %v1435
    %1437 = vdwg.mxu0
    %v1438 = vadd.f32 %v285, %v1436
    %v1439 = vxor.u32 %v1438, 2147483648
    %v1440 = vmul.f32 %v1439, 1.442695
    %v1441 = vpow.pop %v1440
    %v1442 = vadd.f32 %v1441, 1.0
    %v1443 = vrcp.pop %v1442
    %v1444 = vmul.f32 %v1442, %v1443
    %v1445 = vsub.f32 1.0, %v1444
    %v1446 = vmul.f32 %v1443, %v1445
    %v1447 = vadd.f32 %v1443, %v1446
    %vm1448 = vweird.f32 %v1442
    %vm1449 = vweird.f32 %v1443
    %vm1450 = vmor %vm1448, %vm1449
    %v1451 = vsel %vm1450, %v1443, %v1447
    %v1452 = vand.u32 2147483647, %v1442
    %vm1453 = vcmp.eq.f32.partialorder %v1452, 8.507059e+37
    %v1454 = vand.u32 %v1442, 2147483648
    %v1455 = vor.u32 1.1754944e-38, %v1454
    %v1456 = vsel %vm1453, %v1455, %v1451
    %v1457 = vmul.f32 1.0, %v1456
    %1458 = vmatpush.msra.mxu0 0.0
    %1459 = vmatpush.msra.mxu0 0.0
    %1460 = vmatpush.msra.mxu0 0.0
    %1461 = vmatpush.msra.mxu0 0.0
    %1462 = vmatpush.msra.mxu0 0.0
    %1463 = vmatpush.msra.mxu0 0.0
    %1464 = vmatpush.msra.mxu0 0.0
    %1465 = vmatpush.msra.mxu0 0.0
    %1466 = vmatpush.msra.mxu0 0.0
    %1467 = vmatpush.msra.mxu0 0.0
    %1468 = vmatpush.msra.mxu0 0.0
    %1469 = vmatpush.msra.mxu0 0.0
    %1470 = vmatpush.msra.mxu0 %v75
    %1471 = vmatpush.msra.mxu0 %v74
    %1472 = vmatpush.msra.mxu0 %v73
    %1473 = vmatpush.msra.mxu0 %v72
    %1474 = vmatmul.f32.gmra.mxu0 %v1416
    %v1475 = vpop.f32.mrf.mxu0
    %v1476 = vadd.f32 %v82, %v1475
    %1477 = vdwg.mxu0
    %v1478 = vmul.f32 %v1457, %v1476
    %v1479 = vadd.f32 %v331, %v1478
    %v1480 = vtanh.pop %v1479
    %v1481 = vsub.f32 %v1414, %v1480
    %1483 = vrot.lane.b32.xlu0 %v1481, 32
    %v1484 = vpop.permute.xlu0 %1483
    %v1486 = vmul.f32 %v1457, %v1484
    %1488 = vrot.lane.b32.xlu0 %v1486, 96
    %v1489 = vpop.permute.xlu0 %1488
    %v1491 = vadd.f32 %v1480, %v1489
    %v1493 = vsel %vm336, %v1491, 0
    %1495 = vmatpush.msra.mxu0 0.0
    %1496 = vmatpush.msra.mxu0 0.0
    %1497 = vmatpush.msra.mxu0 0.0
    %1498 = vmatpush.msra.mxu0 0.0
    %1499 = vmatpush.msra.mxu0 0.0
    %1500 = vmatpush.msra.mxu0 0.0
    %1501 = vmatpush.msra.mxu0 0.0
    %1502 = vmatpush.msra.mxu0 0.0
    %1503 = vmatpush.msra.mxu0 0.0
    %1504 = vmatpush.msra.mxu0 0.0
    %1505 = vmatpush.msra.mxu0 0.0
    %1506 = vmatpush.msra.mxu0 0.0
    %1507 = vmatpush.msra.mxu0 %v71
    %1508 = vmatpush.msra.mxu0 %v70
    %1509 = vmatpush.msra.mxu0 %v69
    %1510 = vmatpush.msra.mxu0 %v68
    %1511 = vmatmul.f32.gmra.mxu0 %v1493
    %v1512 = vpop.f32.mrf.mxu0
    %v1513 = vadd.f32 0.0, %v1512
    %1514 = vdwg.mxu0
    %v1515 = vadd.f32 %v288, %v1513
    %v1516 = vxor.u32 %v1515, 2147483648
    %v1517 = vmul.f32 %v1516, 1.442695
    %v1518 = vpow.pop %v1517
    %v1519 = vadd.f32 %v1518, 1.0
    %v1520 = vrcp.pop %v1519
    %v1521 = vmul.f32 %v1519, %v1520
    %v1522 = vsub.f32 1.0, %v1521
    %v1523 = vmul.f32 %v1520, %v1522
    %v1524 = vadd.f32 %v1520, %v1523
    %vm1525 = vweird.f32 %v1519
    %vm1526 = vweird.f32 %v1520
    %vm1527 = vmor %vm1525, %vm1526
    %v1528 = vsel %vm1527, %v1520, %v1524
    %v1529 = vand.u32 2147483647, %v1519
    %vm1530 = vcmp.eq.f32.partialorder %v1529, 8.507059e+37
    %v1531 = vand.u32 %v1519, 2147483648
    %v1532 = vor.u32 1.1754944e-38, %v1531
    %v1533 = vsel %vm1530, %v1532, %v1528
    %v1534 = vmul.f32 1.0, %v1533
    %1535 = vmatpush.msra.mxu0 0.0
    %1536 = vmatpush.msra.mxu0 0.0
    %1537 = vmatpush.msra.mxu0 0.0
    %1538 = vmatpush.msra.mxu0 0.0
    %1539 = vmatpush.msra.mxu0 0.0
    %1540 = vmatpush.msra.mxu0 0.0
    %1541 = vmatpush.msra.mxu0 0.0
    %1542 = vmatpush.msra.mxu0 0.0
    %1543 = vmatpush.msra.mxu0 0.0
    %1544 = vmatpush.msra.mxu0 0.0
    %1545 = vmatpush.msra.mxu0 0.0
    %1546 = vmatpush.msra.mxu0 0.0
    %1547 = vmatpush.msra.mxu0 %v75
    %1548 = vmatpush.msra.mxu0 %v74
    %1549 = vmatpush.msra.mxu0 %v73
    %1550 = vmatpush.msra.mxu0 %v72
    %1551 = vmatmul.f32.gmra.mxu0 %v1493
    %v1552 = vpop.f32.mrf.mxu0
    %v1553 = vadd.f32 %v82, %v1552
    %1554 = vdwg.mxu0
    %v1555 = vmul.f32 %v1534, %v1553
    %v1556 = vadd.f32 %v334, %v1555
    %v1557 = vtanh.pop %v1556
    %v1558 = vsub.f32 %v1491, %v1557
    %1560 = vrot.lane.b32.xlu0 %v1558, 32
    %v1561 = vpop.permute.xlu0 %1560
    %v1563 = vmul.f32 %v1534, %v1561
    %1565 = vrot.lane.b32.xlu0 %v1563, 96
    %v1566 = vpop.permute.xlu0 %1565
    %v1568 = vadd.f32 %v1557, %v1566
    %v1569 = vld [vmem:[%s16] sm:$0xff]
    %v1570 = vld [vmem:[%s16 + $0x8] sm:$0xff]
    %v1571 = vld [vmem:[%s16 + $0x10] sm:$0xff]
    %v1572 = vld [vmem:[%s16 + $0x18] sm:$0xff]
    %v1573 = vld [vmem:[%s17] sm:$0x1]
    %v1575 = vperm.slane %v1573, 0
    %v1578 = vsel %vm336, %v1568, 0
    %1580 = vmatpush.msra.mxu0 0.0
    %1581 = vmatpush.msra.mxu0 0.0
    %1582 = vmatpush.msra.mxu0 0.0
    %1583 = vmatpush.msra.mxu0 0.0
    %1584 = vmatpush.msra.mxu0 0.0
    %1585 = vmatpush.msra.mxu0 0.0
    %1586 = vmatpush.msra.mxu0 0.0
    %1587 = vmatpush.msra.mxu0 0.0
    %1588 = vmatpush.msra.mxu0 0.0
    %1589 = vmatpush.msra.mxu0 0.0
    %1590 = vmatpush.msra.mxu0 0.0
    %1591 = vmatpush.msra.mxu0 0.0
    %1592 = vmatpush.msra.mxu0 %v1572
    %1593 = vmatpush.msra.mxu0 %v1571
    %1594 = vmatpush.msra.mxu0 %v1570
    %1595 = vmatpush.msra.mxu0 %v1569
    %1596 = vmatmul.f32.gmra.mxu0 %v1031
    %v1597 = vpop.f32.mrf.mxu0
    %v1598 = vadd.f32 %v1575, %v1597
    %1599 = vmatmul.f32.gmra.mxu0 %v1108
    %v1600 = vpop.f32.mrf.mxu0
    %v1601 = vadd.f32 %v1575, %v1600
    %1602 = vmatmul.f32.gmra.mxu0 %v1185
    %v1603 = vpop.f32.mrf.mxu0
    %v1604 = vadd.f32 %v1575, %v1603
    %1605 = vmatmul.f32.gmra.mxu0 %v1262
    %v1606 = vpop.f32.mrf.mxu0
    %v1607 = vadd.f32 %v1575, %v1606
    %1608 = vmatmul.f32.gmra.mxu0 %v1339
    %v1609 = vpop.f32.mrf.mxu0
    %v1610 = vadd.f32 %v1575, %v1609
    %1611 = vmatmul.f32.gmra.mxu0 %v1416
    %v1612 = vpop.f32.mrf.mxu0
    %v1613 = vadd.f32 %v1575, %v1612
    %1614 = vmatmul.f32.gmra.mxu0 %v1493
    %v1615 = vpop.f32.mrf.mxu0
    %v1616 = vadd.f32 %v1575, %v1615
    %1617 = vmatmul.f32.gmra.mxu0 %v1578
    %v1618 = vpop.f32.mrf.mxu0
    %v1619 = vadd.f32 %v1575, %v1618
    %1620 = vdwg.mxu0
    %1621 = vst.msk [vmem:[#allocation2] sm:$0xff] %vm224, %v1598
    %1622 = vst.msk [vmem:[#allocation2 + $0x8] sm:$0xff] %vm224, %v1601
    %1623 = vst.msk [vmem:[#allocation2 + $0x10] sm:$0xff] %vm224, %v1604
    %1624 = vst.msk [vmem:[#allocation2 + $0x18] sm:$0xff] %vm224, %v1607
    %1625 = vst.msk [vmem:[#allocation2 + $0x20] sm:$0xff] %vm224, %v1610
    %1626 = vst.msk [vmem:[#allocation2 + $0x28] sm:$0xff] %vm224, %v1613
    %1627 = vst.msk [vmem:[#allocation2 + $0x30] sm:$0xff] %vm224, %v1616
    %1628 = vst.msk [vmem:[#allocation2 + $0x38] sm:$0xff] %vm224, %v1619
    // Predicated region
    $region74: #{seq2seq_forward.1} parent=1 // pred_check
      _
    $region75: #{seq2seq_forward.1} parent=1 // pred_check_branch
      %1630 = sbr.rel (0) target = $region77
    $region76: #{seq2seq_forward.1} parent=1 // pred_region
      %1632 = vsyncadd [#allocation3], 0
      %s1633 = sshll.u32 [#allocation2], 4
      %s1634 = int_to_ptr.vmem [resolvable:$true] %s1633
      %s1635 = sshll.u32 %s18, 4
      %s1636 = int_to_ptr.hbm [resolvable:$true] %s1635
      %1641 = dma.vmem_to_hbm [thread:$0]  %s1634, 1024, %s1636, [#allocation3], 128, 128, 8
    $region77: #{seq2seq_forward.1} parent=1 // pred_fallthru
      _
    // Predicated region
    $region78: #{seq2seq_forward.1} parent=1 // pred_check
      _
    $region79: #{seq2seq_forward.1} parent=1 // pred_check_branch
      %1643 = sbr.rel (0) target = $region81
    $region80: #{seq2seq_forward.1} parent=1 // pred_region
      %1645 = dma.done [#allocation3], 1024
    $region81: #{seq2seq_forward.1} parent=1 // pred_fallthru
      _
    %1646 = vsyncpa [#allocation3], 1

</llo_original>
